<compile_context>
chip_gen: v7x
topology: tpu7x:2x2x1
jax: 0.10.0
libtpu: 0.0.40
codegen_flags: <defaults>
</compile_context>

<pallas_src>
import functools

import numpy as np
import jax
import jax.numpy as jnp
from jax import lax
from jax.experimental import pallas as pl
from jax.experimental.pallas import tpu as pltpu


def _round_up(x, m):
    return ((x + m - 1) // m) * m


@functools.lru_cache(maxsize=None)
def _roll_uses_np_convention():
    """One-off probe of pltpu.roll's sign convention (defensive).

    Returns True if pltpu.roll(a, shift=1, axis=0)[i] == a[i - 1] (numpy/jnp
    convention).  The kernel needs result[i] == a[i + 1], i.e. shift = rows-1
    under the numpy convention and shift = 1 under the opposite one.
    """
    def kernel(x_ref, o_ref):
        o_ref[...] = pltpu.roll(x_ref[...], shift=1, axis=0)

    x = jnp.arange(8, dtype=jnp.float32).reshape(8, 1) * jnp.ones((8, 128), jnp.float32)
    y = pl.pallas_call(kernel, out_shape=jax.ShapeDtypeStruct((8, 128), jnp.float32))(x)
    return bool(y[1, 0] == 0.0)


def _conv_ds_kernel(x_ref, wcat_ref, wsh_ref, b_ref, o_ref, *scratch,
                    use_roll, row_shift):
    """Fused im2col + GEMM for one (image, Ho-tile, Cout-tile) grid step.

    x_ref:    (T+1, 2, Pp, 2*Cin) padded rows as (pair-row, row parity); column
              pairs packed into lanes as [even-col chans | odd-col chans].
    wcat_ref: (3, 2*Cin, CT)  row kh = [w[kh,0]; w[kh,1]] along K.
    wsh_ref:  (3, 2*Cin, CT)  row kh = [w[kh,2]; 0]       along K.
    b_ref:    (1, CT)         bias tile (zero padded, f32).
    o_ref:    (T*Pp, CT)      output rows r = h_local*Pp + p.
    """
    t = x_ref.shape[0] - 1
    two_cin = x_ref.shape[3]
    rows, ct = o_ref.shape

    acc_cat = jnp.zeros((rows, ct), jnp.float32)
    acc_sh = jnp.zeros((rows, ct), jnp.float32)

    # H-tap kh reads padded row 2*h_local + kh = 2*(h_local + off) + par.
    # TODO(synk): for small Cin, lane-concatenate the three slabs and fuse the
    # taps into a single K=6*Cin dot per accumulator (3x fewer MXU pushes).
    for kh, (off, par) in enumerate(((0, 0), (0, 1), (1, 0))):
        # (t, 1, Pp, 2*Cin) -> (t*Pp, 2*Cin): Pp % 8 == 0 and the lane dim is
        # untouched, so the collapse is layout-trivial.
        slab = x_ref[off:off + t, par:par + 1].reshape(rows, two_cin)
        # kw = 0 / 1: even + odd column of the current pair.
        acc_cat = acc_cat + jnp.dot(slab, wcat_ref[kh],
                                    preferred_element_type=jnp.float32)
        # kw = 2: even column of the *next* pair -> accumulate unshifted and
        # shift the whole accumulator by one row at the end.  wsh's odd-col
        # half is zero, so the full slab is used (no partial-lane slice).
        acc_sh = acc_sh + jnp.dot(slab, wsh_ref[kh],
                                  preferred_element_type=jnp.float32)

    if use_roll:
        # out[r] needs acc_sh[r + 1]: one XLU sublane rotate.  Rows that wrap
        # land in column pair Pp-1 (>= Wo), which the wrapper drops.
        shifted = pltpu.roll(acc_sh, shift=row_shift, axis=0)
    else:
        # Fallback: realise the shift through a VMEM bounce buffer.
        sh = scratch[0]
        sh[:rows, :] = acc_sh
        sh[rows:, :] = jnp.zeros((8, ct), jnp.float32)
        shifted = sh[1:rows + 1, :]

    o_ref[...] = (acc_cat + shifted + b_ref[...]).astype(o_ref.dtype)


def _pick_cout_tile(Cp):
    """256 matches the v6e/v7x MXU width; 128 on v5e (128-wide MXU, small
    scoped-VMEM default)."""
    try:
        kind = jax.devices()[0].device_kind.lower()
        prefer = 128 if ("v5 lite" in kind or "v5e" in kind) else 256
    except Exception:  # pragma: no cover
        prefer = 256
    return prefer if Cp % prefer == 0 else 128


def _pick_row_tile(Ho, Pp, Cin, CT, x_itemsize):
    """Largest divisor of Ho whose per-step working set fits a small budget,
    keeping blocks + accumulators far inside v7x's 64 MiB VMEM."""
    budget = 6 * 1024 * 1024

    def cost(t):
        rows = t * Pp
        return (2 * rows * CT * 4                                # f32 accumulators
                + 2 * rows * CT * 4                              # double-buffered out
                + 2 * (t + 1) * 2 * Pp * 2 * Cin * x_itemsize)   # double-buffered x

    if cost(Ho) <= budget:
        return Ho
    best = 1
    for t in range(2, Ho):
        if Ho % t == 0 and cost(t) <= budget:
            best = t
    return best


def conv_downsample(x, weight, bias, *, compute_dtype=None):
    """Conv2d(3x3, stride 2, pad 1) on NHWC input via a fused Pallas kernel.

    x:      (B, H, W, Cin)     NHWC
    weight: (Cout, Cin, 3, 3)  PyTorch Conv2d layout
    bias:   (Cout,)
    compute_dtype: optional MXU operand dtype (e.g. jnp.bfloat16); the
        accumulation stays in f32.  None keeps the input dtype.
    returns (B, Ho, Wo, Cout)  NHWC, Ho = ceil(H/2), Wo = ceil(W/2)
    """
    B, H, W, Cin = x.shape
    Cout = weight.shape[0]
    out_dtype = x.dtype
    Ho = (H - 1) // 2 + 1
    Wo = (W - 1) // 2 + 1

    Pp = _round_up(Wo + 1, 8)            # column pairs per padded row
    assert Pp >= Wo + 1                  # shift wrap must land in a dropped column
    Hp = 2 * (Ho + 1)                    # padded height
    Wp = 2 * Pp                          # padded width
    Cp = _round_up(Cout, 128)            # lane-dense output channels
    CT = _pick_cout_tile(Cp)
    n_ct = Cp // CT

    if compute_dtype is not None:        # bf16 MXU path: cast before the pad
        x = x.astype(compute_dtype)
        weight = weight.astype(compute_dtype)

    THo = _pick_row_tile(Ho, Pp, Cin, CT, x.dtype.itemsize)
    n_ho = Ho // THo
    rows = THo * Pp

    # --- activations: one zero-pad; the reshape is row-major / metadata-only.
    xp = jnp.pad(x, ((0, 0), (1, Hp - H - 1), (1, Wp - W - 1), (0, 0)))
    xp = xp.reshape(B, Ho + 1, 2, Pp, 2 * Cin)
    if n_ho == 1:
        xg = xp.reshape(B * (Ho + 1), 2, Pp, 2 * Cin)
    else:
        # Store each Ho-tile together with its one-pair-row halo so every grid
        # step reads a plain, non-overlapping block (duplicates n_ho-1 rows).
        xg = jnp.concatenate(
            [xp[:, i * THo:i * THo + THo + 1] for i in range(n_ho)], axis=1
        ).reshape(B * n_ho * (THo + 1), 2, Pp, 2 * Cin)

    # --- weights: (Cout, Cin, 3, 3) -> (kh, kw, Cin, Cout), pad Cout -> Cp.
    wt = jnp.transpose(weight, (2, 3, 1, 0))
    wt = jnp.pad(wt, ((0, 0), (0, 0), (0, 0), (0, Cp - Cout)))
    w_cat = jnp.concatenate([wt[:, 0], wt[:, 1]], axis=1)                  # (3, 2*Cin, Cp)
    w_sh = jnp.concatenate([wt[:, 2], jnp.zeros_like(wt[:, 2])], axis=1)   # (3, 2*Cin, Cp)
    b_row = jnp.pad(bias, (0, Cp - Cout)).reshape(1, Cp).astype(jnp.float32)

    cost = pl.CostEstimate(
        flops=2 * B * Ho * Wo * Cout * 9 * Cin,
        transcendentals=0,
        bytes_accessed=int(xg.size * xg.dtype.itemsize
                           + (w_cat.size + w_sh.size) * w_cat.dtype.itemsize
                           + B * Ho * Pp * Cp * np.dtype(out_dtype).itemsize),
    )

    x_index = lambda b, i, j: (b * n_ho + i, 0, 0, 0)
    w_index = lambda b, i, j: (0, 0, j)
    bias_index = lambda b, i, j: (0, j)
    o_index = lambda b, i, j: (b * n_ho + i, j)

    def build(use_roll, row_shift, single_buffer_x):
        x_kwargs = {}
        if single_buffer_x:
            # x is grid-invariant along the inner Cout-tile axis: one buffer
            # saves the largest VMEM block (it is only re-fetched when the
            # (batch, Ho-tile) indices change).
            x_kwargs["pipeline_mode"] = pl.Buffered(buffer_count=1)
        kernel = functools.partial(_conv_ds_kernel, use_roll=use_roll,
                                   row_shift=row_shift)
        scratch = [] if use_roll else [pltpu.VMEM((rows + 8, CT), jnp.float32)]
        return pl.pallas_call(
            kernel,
            out_shape=jax.ShapeDtypeStruct((B * Ho * Pp, Cp), out_dtype),
            grid_spec=pltpu.PrefetchScalarGridSpec(
                num_scalar_prefetch=0,
                grid=(B, n_ho, n_ct),               # Cout tile innermost
                in_specs=[
                    pl.BlockSpec((THo + 1, 2, Pp, 2 * Cin), x_index, **x_kwargs),
                    pl.BlockSpec((3, 2 * Cin, CT), w_index),
                    pl.BlockSpec((3, 2 * Cin, CT), w_index),
                    pl.BlockSpec((1, CT), bias_index),
                ],
                out_specs=pl.BlockSpec((rows, CT), o_index),
                scratch_shapes=scratch,
            ),
            compiler_params=pltpu.CompilerParams(
                dimension_semantics=("parallel", "parallel", "arbitrary"),
                vmem_limit_bytes=48 * 1024 * 1024,   # ~75% of v7x's 64 MiB
            ),
            cost_estimate=cost,
        )

    # Preferred variant first; fall back if this JAX/Mosaic build rejects
    # pl.Buffered(1) or the sublane roll.
    variants = ((True, True), (True, False), (False, False))
    last_err = None
    for use_roll, single_buffer_x in variants:
        try:
            row_shift = 0
            if use_roll:
                row_shift = (rows - 1) if _roll_uses_np_convention() else 1
            out2 = build(use_roll, row_shift, single_buffer_x)(xg, w_cat, w_sh, b_row)
            break
        except Exception as e:  # pragma: no cover - feature fallback
            last_err = e
    else:
        raise last_err

    # TODO(synk): consumers that tolerate the padded (B, Ho, Pp, Cp) layout can
    # skip this depad slice (it re-reads/writes the whole output through HBM).
    return out2.reshape(B, Ho, Pp, Cp)[:, :, :Wo, :Cout]


def _reference_conv_downsample(x, weight, bias):
    """Pure-JAX reference (matches torch Conv2d stride=2 pad=1 on NCHW)."""
    x_nchw = jnp.transpose(x, (0, 3, 1, 2))
    y = lax.conv_general_dilated(
        x_nchw, weight,
        window_strides=(2, 2),
        padding=((1, 1), (1, 1)),
        dimension_numbers=("NCHW", "OIHW", "NCHW"),
    )
    y = y + bias.reshape(1, -1, 1, 1)
    return jnp.transpose(y, (0, 2, 3, 1))  # back to NHWC


if __name__ == "__main__":
    key = jax.random.PRNGKey(0)
    k_x, k_w, k_b = jax.random.split(key, 3)

    B, H, W = 2, 16, 16
    C_IN, C_OUT = 4, 8

    x = jax.random.normal(k_x, (B, H, W, C_IN), dtype=jnp.float32)
    weight = jax.random.normal(k_w, (C_OUT, C_IN, 3, 3), dtype=jnp.float32) * 0.1
    bias = jax.random.normal(k_b, (C_OUT,), dtype=jnp.float32) * 0.1

    out = jax.block_until_ready(conv_downsample(x, weight, bias))
    ref = jax.block_until_ready(_reference_conv_downsample(x, weight, bias))
    assert out.shape == (B, 8, 8, C_OUT), out.shape
    assert jnp.allclose(out, ref, atol=1e-4, rtol=1e-4), "fp32 mismatch vs reference"

    # bf16 MXU path (review item): looser tolerance vs the f32 reference.
    out_bf16 = jax.block_until_ready(
        conv_downsample(x, weight, bias, compute_dtype=jnp.bfloat16))
    assert jnp.allclose(out_bf16, ref, atol=5e-2, rtol=5e-2), "bf16 mismatch"

    # Odd spatial sizes / unaligned Cout (review correctness concern).
    k_x2, k_w2, k_b2 = jax.random.split(jax.random.PRNGKey(1), 3)
    x2 = jax.random.normal(k_x2, (1, 9, 11, 4), dtype=jnp.float32)
    w2 = jax.random.normal(k_w2, (6, 4, 3, 3), dtype=jnp.float32) * 0.1
    b2 = jax.random.normal(k_b2, (6,), dtype=jnp.float32) * 0.1
    out2 = jax.block_until_ready(conv_downsample(x2, w2, b2))
    ref2 = jax.block_until_ready(_reference_conv_downsample(x2, w2, b2))
    assert out2.shape == (1, 5, 6, 6), out2.shape
    assert jnp.allclose(out2, ref2, atol=1e-4, rtol=1e-4), "odd-shape mismatch"

    print("KERNEL_OK")
</pallas_src>

<mosaic_0001>
module attributes {stable_mosaic.version = 11 : i64} {
  func.func @kernel(%arg0: memref<8x128xf32, #tpu.memory_space<vmem>>, %arg1: memref<8x128xf32, #tpu.memory_space<vmem>>) attributes {dimension_semantics = [], scalar_prefetch = 0 : i64, scratch_operands = 0 : i64, tpu.core_type = #tpu.core_type<tc>} {
    %c0 = arith.constant 0 : index
    %c0_0 = arith.constant 0 : index
    %0 = vector.load %arg0[%c0, %c0_0] : memref<8x128xf32, #tpu.memory_space<vmem>>, vector<8x128xf32>
    %c1_i32 = arith.constant 1 : i32
    %1 = tpu.dynamic_rotate %0 by %c1_i32 dim 0 : vector<8x128xf32>, i32 -> vector<8x128xf32>
    %c0_1 = arith.constant 0 : index
    %c0_2 = arith.constant 0 : index
    %2 = vector.load %arg1[%c0_1, %c0_2] : memref<8x128xf32, #tpu.memory_space<vmem>>, vector<8x128xf32>
    tpu.vector_store %arg1[%c0_1, %c0_2], %1 {strides = array<i32>} : memref<8x128xf32, #tpu.memory_space<vmem>>, vector<8x128xf32>,
    return
  }
}

module attributes {stable_mosaic.version = 11 : i64} {
  func.func @kernel(%arg0: memref<8x128xf32, #tpu.memory_space<vmem>>, %arg1: memref<8x128xf32, #tpu.memory_space<vmem>>) attributes {dimension_semantics = [], scalar_prefetch = 0 : i64, scratch_operands = 0 : i64, tpu.core_type = #tpu.core_type<tc>} {
    %c0 = arith.constant 0 : index
    %c0_0 = arith.constant 0 : index
    %0 = vector.load %arg0[%c0, %c0_0] : memref<8x128xf32, #tpu.memory_space<vmem>>, vector<8x128xf32>
    %c1_i32 = arith.constant 1 : i32
    %1 = tpu.dynamic_rotate %0 by %c1_i32 dim 0 : vector<8x128xf32>, i32 -> vector<8x128xf32>
    %c0_1 = arith.constant 0 : index
    %c0_2 = arith.constant 0 : index
    %2 = vector.load %arg1[%c0_1, %c0_2] : memref<8x128xf32, #tpu.memory_space<vmem>>, vector<8x128xf32>
    tpu.vector_store %arg1[%c0_1, %c0_2], %1 {strides = array<i32>} : memref<8x128xf32, #tpu.memory_space<vmem>>, vector<8x128xf32>,
    return
  }
}

module attributes {stable_mosaic.version = 11 : i64} {
  func.func @_conv_ds_kernel(%arg0: i32, %arg1: i32, %arg2: i32, %arg3: memref<9x2x16x8xf32, #tpu.memory_space<vmem>>, %arg4: memref<3x8x128xf32, #tpu.memory_space<vmem>>, %arg5: memref<3x8x128xf32, #tpu.memory_space<vmem>>, %arg6: memref<1x128xf32, #tpu.memory_space<vmem>>, %arg7: memref<128x128xf32, #tpu.memory_space<vmem>>, %arg8: memref<136x128xf32, #tpu.memory_space<vmem>>) attributes {dimension_semantics = [#tpu.dimension_semantics<parallel>, #tpu.dimension_semantics<parallel>, #tpu.dimension_semantics<arbitrary>], iteration_bounds = array<i64: 2, 1, 1>, scalar_prefetch = 0 : i64, scratch_operands = 1 : i64, tpu.core_type = #tpu.core_type<tc>, window_params = [{transform_indices = @transform_0, window_bounds = array<i64: 9, 2, 16, 8>}, {transform_indices = @transform_1, window_bounds = array<i64: 3, 8, 128>}, {transform_indices = @transform_2, window_bounds = array<i64: 3, 8, 128>}, {transform_indices = @transform_3, window_bounds = array<i64: 1, 128>}, {transform_indices = @transform_4, window_bounds = array<i64: 128, 128>}]} {
    %cst = arith.constant 0.000000e+00 : f32
    %0 = vector.broadcast %cst : f32 to vector<128x128xf32>
    %cst_0 = arith.constant 0.000000e+00 : f32
    %1 = vector.broadcast %cst_0 : f32 to vector<128x128xf32>
    %c0 = arith.constant 0 : index
    %c0_1 = arith.constant 0 : index
    %c0_2 = arith.constant 0 : index
    %c0_3 = arith.constant 0 : index
    %2 = vector.load %arg3[%c0, %c0_1, %c0_2, %c0_3] : memref<9x2x16x8xf32, #tpu.memory_space<vmem>>, vector<8x1x16x8xf32>
    %3 = vector.shape_cast %2 : vector<8x1x16x8xf32> to vector<128x8xf32>
    %c0_4 = arith.constant 0 : index
    %c0_5 = arith.constant 0 : index
    %c0_6 = arith.constant 0 : index
    %4 = vector.load %arg4[%c0_4, %c0_5, %c0_6] : memref<3x8x128xf32, #tpu.memory_space<vmem>>, vector<1x8x128xf32>
    %5 = vector.shape_cast %4 : vector<1x8x128xf32> to vector<8x128xf32>
    %cst_7 = arith.constant dense<0.000000e+00> : vector<128x128xf32>
    %6 = tpu.matmul %3, %5, %cst_7 {dimension_numbers = #tpu.dot_dimension_numbers<[1], [0], [0], [1], [0, 0, 1, 1], [], []>} : vector<128x8xf32>, vector<8x128xf32>, vector<128x128xf32> -> vector<128x128xf32>
    %7 = arith.addf %0, %6 : vector<128x128xf32>
    %c0_8 = arith.constant 0 : index
    %c0_9 = arith.constant 0 : index
    %c0_10 = arith.constant 0 : index
    %8 = vector.load %arg5[%c0_8, %c0_9, %c0_10] : memref<3x8x128xf32, #tpu.memory_space<vmem>>, vector<1x8x128xf32>
    %9 = vector.shape_cast %8 : vector<1x8x128xf32> to vector<8x128xf32>
    %cst_11 = arith.constant dense<0.000000e+00> : vector<128x128xf32>
    %10 = tpu.matmul %3, %9, %cst_11 {dimension_numbers = #tpu.dot_dimension_numbers<[1], [0], [0], [1], [0, 0, 1, 1], [], []>} : vector<128x8xf32>, vector<8x128xf32>, vector<128x128xf32> -> vector<128x128xf32>
    %11 = arith.addf %1, %10 : vector<128x128xf32>
    %c0_12 = arith.constant 0 : index
    %c1 = arith.constant 1 : index
    %c0_13 = arith.constant 0 : index
    %c0_14 = arith.constant 0 : index
    %12 = vector.load %arg3[%c0_12, %c1, %c0_13, %c0_14] : memref<9x2x16x8xf32, #tpu.memory_space<vmem>>, vector<8x1x16x8xf32>
    %13 = vector.shape_cast %12 : vector<8x1x16x8xf32> to vector<128x8xf32>
    %c1_15 = arith.constant 1 : index
    %c0_16 = arith.constant 0 : index
    %c0_17 = arith.constant 0 : index
    %14 = vector.load %arg4[%c1_15, %c0_16, %c0_17] : memref<3x8x128xf32, #tpu.memory_space<vmem>>, vector<1x8x128xf32>
    %15 = vector.shape_cast %14 : vector<1x8x128xf32> to vector<8x128xf32>
    %cst_18 = arith.constant dense<0.000000e+00> : vector<128x128xf32>
    %16 = tpu.matmul %13, %15, %cst_18 {dimension_numbers = #tpu.dot_dimension_numbers<[1], [0], [0], [1], [0, 0, 1, 1], [], []>} : vector<128x8xf32>, vector<8x128xf32>, vector<128x128xf32> -> vector<128x128xf32>
    %17 = arith.addf %7, %16 : vector<128x128xf32>
    %c1_19 = arith.constant 1 : index
    %c0_20 = arith.constant 0 : index
    %c0_21 = arith.constant 0 : index
    %18 = vector.load %arg5[%c1_19, %c0_20, %c0_21] : memref<3x8x128xf32, #tpu.memory_space<vmem>>, vector<1x8x128xf32>
    %19 = vector.shape_cast %18 : vector<1x8x128xf32> to vector<8x128xf32>
    %cst_22 = arith.constant dense<0.000000e+00> : vector<128x128xf32>
    %20 = tpu.matmul %13, %19, %cst_22 {dimension_numbers = #tpu.dot_dimension_numbers<[1], [0], [0], [1], [0, 0, 1, 1], [], []>} : vector<128x8xf32>, vector<8x128xf32>, vector<128x128xf32> -> vector<128x128xf32>
    %21 = arith.addf %11, %20 : vector<128x128xf32>
    %c1_23 = arith.constant 1 : index
    %c0_24 = arith.constant 0 : index
    %c0_25 = arith.constant 0 : index
    %c0_26 = arith.constant 0 : index
    %22 = vector.load %arg3[%c1_23, %c0_24, %c0_25, %c0_26] : memref<9x2x16x8xf32, #tpu.memory_space<vmem>>, vector<8x1x16x8xf32>
    %23 = vector.shape_cast %22 : vector<8x1x16x8xf32> to vector<128x8xf32>
    %c2 = arith.constant 2 : index
    %c0_27 = arith.constant 0 : index
    %c0_28 = arith.constant 0 : index
    %24 = vector.load %arg4[%c2, %c0_27, %c0_28] : memref<3x8x128xf32, #tpu.memory_space<vmem>>, vector<1x8x128xf32>
    %25 = vector.shape_cast %24 : vector<1x8x128xf32> to vector<8x128xf32>
    %cst_29 = arith.constant dense<0.000000e+00> : vector<128x128xf32>
    %26 = tpu.matmul %23, %25, %cst_29 {dimension_numbers = #tpu.dot_dimension_numbers<[1], [0], [0], [1], [0, 0, 1, 1], [], []>} : vector<128x8xf32>, vector<8x128xf32>, vector<128x128xf32> -> vector<128x128xf32>
    %27 = arith.addf %17, %26 : vector<128x128xf32>
    %c2_30 = arith.constant 2 : index
    %c0_31 = arith.constant 0 : index
    %c0_32 = arith.constant 0 : index
    %28 = vector.load %arg5[%c2_30, %c0_31, %c0_32] : memref<3x8x128xf32, #tpu.memory_space<vmem>>, vector<1x8x128xf32>
    %29 = vector.shape_cast %28 : vector<1x8x128xf32> to vector<8x128xf32>
    %cst_33 = arith.constant dense<0.000000e+00> : vector<128x128xf32>
    %30 = tpu.matmul %23, %29, %cst_33 {dimension_numbers = #tpu.dot_dimension_numbers<[1], [0], [0], [1], [0, 0, 1, 1], [], []>} : vector<128x8xf32>, vector<8x128xf32>, vector<128x128xf32> -> vector<128x128xf32>
    %31 = arith.addf %21, %30 : vector<128x128xf32>
    %c0_34 = arith.constant 0 : index
    %c0_35 = arith.constant 0 : index
    %32 = vector.load %arg8[%c0_34, %c0_35] : memref<136x128xf32, #tpu.memory_space<vmem>>, vector<128x128xf32>
    tpu.vector_store %arg8[%c0_34, %c0_35], %31 {strides = array<i32>} : memref<136x128xf32, #tpu.memory_space<vmem>>, vector<128x128xf32>,
    %cst_36 = arith.constant 0.000000e+00 : f32
    %33 = vector.broadcast %cst_36 : f32 to vector<8x128xf32>
    %c128 = arith.constant 128 : index
    %c0_37 = arith.constant 0 : index
    %34 = vector.load %arg8[%c128, %c0_37] : memref<136x128xf32, #tpu.memory_space<vmem>>, vector<8x128xf32>
    tpu.vector_store %arg8[%c128, %c0_37], %33 {strides = array<i32>} : memref<136x128xf32, #tpu.memory_space<vmem>>, vector<8x128xf32>,
    %c1_38 = arith.constant 1 : index
    %c0_39 = arith.constant 0 : index
    %35 = vector.load %arg8[%c1_38, %c0_39] : memref<136x128xf32, #tpu.memory_space<vmem>>, vector<128x128xf32>
    %36 = arith.addf %27, %35 : vector<128x128xf32>
    %c0_40 = arith.constant 0 : index
    %c0_41 = arith.constant 0 : index
    %37 = vector.load %arg6[%c0_40, %c0_41] : memref<1x128xf32, #tpu.memory_space<vmem>>, vector<1x128xf32>
    %38 = vector.broadcast %37 : vector<1x128xf32> to vector<128x128xf32>
    %39 = arith.addf %36, %38 : vector<128x128xf32>
    %c0_42 = arith.constant 0 : index
    %c0_43 = arith.constant 0 : index
    %40 = vector.load %arg7[%c0_42, %c0_43] : memref<128x128xf32, #tpu.memory_space<vmem>>, vector<128x128xf32>
    tpu.vector_store %arg7[%c0_42, %c0_43], %39 {strides = array<i32>} : memref<128x128xf32, #tpu.memory_space<vmem>>, vector<128x128xf32>,
    return
  }
  func.func @transform_0(%arg0: i32, %arg1: i32, %arg2: i32) -> (i32, i32, i32, i32) {
    %c1_i32 = arith.constant 1 : i32
    %0 = arith.muli %arg0, %c1_i32 : i32
    %1 = arith.addi %0, %arg1 : i32
    %c0_i32 = arith.constant 0 : i32
    %c0_i32_0 = arith.constant 0 : i32
    %c0_i32_1 = arith.constant 0 : i32
    %c0_i32_2 = arith.constant 0 : i32
    return %1, %c0_i32, %c0_i32_0, %c0_i32_1 : i32, i32, i32, i32
  }
  func.func @transform_1(%arg0: i32, %arg1: i32, %arg2: i32) -> (i32, i32, i32) {
    %c0_i32 = arith.constant 0 : i32
    %c0_i32_0 = arith.constant 0 : i32
    %c0_i32_1 = arith.constant 0 : i32
    return %c0_i32, %c0_i32_0, %arg2 : i32, i32, i32
  }
  func.func @transform_2(%arg0: i32, %arg1: i32, %arg2: i32) -> (i32, i32, i32) {
    %c0_i32 = arith.constant 0 : i32
    %c0_i32_0 = arith.constant 0 : i32
    %c0_i32_1 = arith.constant 0 : i32
    return %c0_i32, %c0_i32_0, %arg2 : i32, i32, i32
  }
  func.func @transform_3(%arg0: i32, %arg1: i32, %arg2: i32) -> (i32, i32) {
    %c0_i32 = arith.constant 0 : i32
    %c0_i32_0 = arith.constant 0 : i32
    return %c0_i32, %arg2 : i32, i32
  }
  func.func @transform_4(%arg0: i32, %arg1: i32, %arg2: i32) -> (i32, i32) {
    %c1_i32 = arith.constant 1 : i32
    %0 = arith.muli %arg0, %c1_i32 : i32
    %1 = arith.addi %0, %arg1 : i32
    %c0_i32 = arith.constant 0 : i32
    return %1, %arg2 : i32, i32
  }
}

</mosaic_0001>

<llo_original>
// kernel: tpu_custom_call.1
$region0: #{tpu_custom_call.1}
  #allocation0 [shape = 'u32[]', space=smem, size = 0x4, offset = 0x4, fixed_abs, tag = 'smem constant byte address 0x4 - core index']
  #allocation1 [shape = 'u32[144,128]{1,0:T(1,128)}', space=vmem, size = 0x12000, scoped, tag = 'internal scratch']
  %s0 = inlined_call_operand.hbm [shape: f32[8,128], index: 0, kind: input, shape index: {}]
  %s1 = inlined_call_operand.hbm [shape: f32[8,128], index: 1, kind: output, shape index: {}]
  %s2 = sld [smem:[#allocation0]]
  $region18: #{tpu_custom_call.1} parent=0
    _
  %s4 = ssub.s32 1, %s2
  %s5 = scalar_select 0, %s4, %s2
  $region1: #{tpu_custom_call.1} parent=0
    #allocation2 [shape = 'u8[4096]{0}', space=vmem, size = 0x1000, scoped, tag = 'input window, operand 0, single buffered']
    #allocation3 [shape = 's32[1]{0}', space=sflag, size = 0x4, scoped, tag = 'scoped memory for tpu_custom_call.1']
    #allocation4 [shape = 's32[1]{0}', space=sflag, size = 0x4, scoped, tag = 'scoped memory for tpu_custom_call.1']
    #allocation5 [shape = 'u8[4096]{0}', space=vmem, size = 0x1000, scoped, tag = 'output window, operand 0, single buffered']
    %6 = vsyncpa [#allocation3], 0
    %7 = vsyncpa [#allocation4], 0
    // Predicated region
    $region2: #{tpu_custom_call.1} parent=1 // pred_check
      _
    $region3: #{tpu_custom_call.1} parent=1 // pred_check_branch
      %9 = sbr.rel (0) target = $region5
    $region4: #{tpu_custom_call.1} parent=1 // pred_region
      %s11 = ssub.s32 128, 128
      %12 = vsyncadd [#allocation3], %s11
      %s14 = sshll.u32 [#allocation2], 4
      %s15 = int_to_ptr.vmem [resolvable:$true] %s14
      %17 = dma.hbm_to_vmem [thread:$0]  %s0, 128, %s15, [#allocation3]
    $region5: #{tpu_custom_call.1} parent=1 // pred_fallthru
      _
    // Predicated region
    $region6: #{tpu_custom_call.1} parent=1 // pred_check
      _
    $region7: #{tpu_custom_call.1} parent=1 // pred_check_branch
      %19 = sbr.rel (0) target = $region9
    $region8: #{tpu_custom_call.1} parent=1 // pred_region
      %20 = dma.done [#allocation3], 128
    $region9: #{tpu_custom_call.1} parent=1 // pred_fallthru
      _
    %v21 = vld [vmem:[#allocation2] sm:$0xff]
    %v22 = vrot.slane %v21, 7
    %23 = vst [vmem:[#allocation5] sm:$0xff] %v22
    // Predicated region
    $region10: #{tpu_custom_call.1} parent=1 // pred_check
      _
    $region11: #{tpu_custom_call.1} parent=1 // pred_check_branch
      %25 = sbr.rel (0) target = $region13
    $region12: #{tpu_custom_call.1} parent=1 // pred_region
      %s27 = ssub.s32 128, 128
      %28 = vsyncadd [#allocation4], %s27
      %s30 = sshll.u32 [#allocation5], 4
      %s31 = int_to_ptr.vmem [resolvable:$true] %s30
      %33 = dma.vmem_to_hbm [thread:$0]  %s31, 128, %s1, [#allocation4]
    $region13: #{tpu_custom_call.1} parent=1 // pred_fallthru
      _
    // Predicated region
    $region14: #{tpu_custom_call.1} parent=1 // pred_check
      _
    $region15: #{tpu_custom_call.1} parent=1 // pred_check_branch
      %35 = sbr.rel (0) target = $region17
    $region16: #{tpu_custom_call.1} parent=1 // pred_region
      %36 = dma.done [#allocation4], 128
    $region17: #{tpu_custom_call.1} parent=1 // pred_fallthru
      _
    %37 = vsyncpa [#allocation3], 1
    %38 = vsyncpa [#allocation4], 1

// kernel: tpu_custom_call.1
$region0: #{tpu_custom_call.1}
  #allocation0 [shape = 'u32[]', space=smem, size = 0x4, offset = 0x4, fixed_abs, tag = 'smem constant byte address 0x4 - core index']
  #allocation1 [shape = 'u32[144,128]{1,0:T(1,128)}', space=vmem, size = 0x12000, scoped, tag = 'internal scratch']
  %s0 = inlined_call_operand.hbm [shape: f32[8,128], index: 0, kind: input, shape index: {}]
  %s1 = inlined_call_operand.hbm [shape: f32[8,128], index: 1, kind: output, shape index: {}]
  %s2 = sld [smem:[#allocation0]]
  $region18: #{tpu_custom_call.1} parent=0
    _
  %s4 = ssub.s32 1, %s2
  %s5 = scalar_select 0, %s4, %s2
  $region1: #{tpu_custom_call.1} parent=0
    #allocation2 [shape = 'u8[4096]{0}', space=vmem, size = 0x1000, scoped, tag = 'input window, operand 0, single buffered']
    #allocation3 [shape = 's32[1]{0}', space=sflag, size = 0x4, scoped, tag = 'scoped memory for tpu_custom_call.1']
    #allocation4 [shape = 's32[1]{0}', space=sflag, size = 0x4, scoped, tag = 'scoped memory for tpu_custom_call.1']
    #allocation5 [shape = 'u8[4096]{0}', space=vmem, size = 0x1000, scoped, tag = 'output window, operand 0, single buffered']
    %6 = vsyncpa [#allocation3], 0
    %7 = vsyncpa [#allocation4], 0
    // Predicated region
    $region2: #{tpu_custom_call.1} parent=1 // pred_check
      _
    $region3: #{tpu_custom_call.1} parent=1 // pred_check_branch
      %9 = sbr.rel (0) target = $region5
    $region4: #{tpu_custom_call.1} parent=1 // pred_region
      %s11 = ssub.s32 128, 128
      %12 = vsyncadd [#allocation3], %s11
      %s14 = sshll.u32 [#allocation2], 4
      %s15 = int_to_ptr.vmem [resolvable:$true] %s14
      %17 = dma.hbm_to_vmem [thread:$0]  %s0, 128, %s15, [#allocation3]
    $region5: #{tpu_custom_call.1} parent=1 // pred_fallthru
      _
    // Predicated region
    $region6: #{tpu_custom_call.1} parent=1 // pred_check
      _
    $region7: #{tpu_custom_call.1} parent=1 // pred_check_branch
      %19 = sbr.rel (0) target = $region9
    $region8: #{tpu_custom_call.1} parent=1 // pred_region
      %20 = dma.done [#allocation3], 128
    $region9: #{tpu_custom_call.1} parent=1 // pred_fallthru
      _
    %v21 = vld [vmem:[#allocation2] sm:$0xff]
    %v22 = vrot.slane %v21, 7
    %23 = vst [vmem:[#allocation5] sm:$0xff] %v22
    // Predicated region
    $region10: #{tpu_custom_call.1} parent=1 // pred_check
      _
    $region11: #{tpu_custom_call.1} parent=1 // pred_check_branch
      %25 = sbr.rel (0) target = $region13
    $region12: #{tpu_custom_call.1} parent=1 // pred_region
      %s27 = ssub.s32 128, 128
      %28 = vsyncadd [#allocation4], %s27
      %s30 = sshll.u32 [#allocation5], 4
      %s31 = int_to_ptr.vmem [resolvable:$true] %s30
      %33 = dma.vmem_to_hbm [thread:$0]  %s31, 128, %s1, [#allocation4]
    $region13: #{tpu_custom_call.1} parent=1 // pred_fallthru
      _
    // Predicated region
    $region14: #{tpu_custom_call.1} parent=1 // pred_check
      _
    $region15: #{tpu_custom_call.1} parent=1 // pred_check_branch
      %35 = sbr.rel (0) target = $region17
    $region16: #{tpu_custom_call.1} parent=1 // pred_region
      %36 = dma.done [#allocation4], 128
    $region17: #{tpu_custom_call.1} parent=1 // pred_fallthru
      _
    %37 = vsyncpa [#allocation3], 1
    %38 = vsyncpa [#allocation4], 1

// kernel: tpu_custom_call.1
$region0: #{tpu_custom_call.1}
  #allocation0 [shape = 'u32[]', space=smem, size = 0x4, offset = 0x4, fixed_abs, tag = 'smem constant byte address 0x4 - core index']
  #allocation1 [shape = 'u32[144,128]{1,0:T(1,128)}', space=vmem, size = 0x12000, scoped, tag = 'internal scratch']
  #allocation2 [shape = 'f32[136,128]{1,0:T(8,128)}', space=vmem, size = 0x11000, scoped, tag = 'scratch operand']
  %s0 = inlined_call_operand.vmem [shape: f32[18,2,16,8], index: 0, kind: input, shape index: {}]
  %s1 = inlined_call_operand.vmem [shape: f32[3,8,128], index: 1, kind: input, shape index: {}]
  %s2 = inlined_call_operand.vmem [shape: f32[3,8,128], index: 2, kind: input, shape index: {}]
  %s3 = inlined_call_operand.vmem [shape: f32[1,128], index: 3, kind: input, shape index: {}]
  %s4 = inlined_call_operand.hbm [shape: f32[256,128], index: 4, kind: output, shape index: {}]
  %s5 = sld [smem:[#allocation0]]
  $region49: #{tpu_custom_call.1} parent=0
    _
  %s7 = ssub.s32 1, %s5
  %s8 = scalar_select 0, %s7, %s5
  $region1: #{tpu_custom_call.1} parent=0
    #allocation3 [shape = 'u8[131072]{0}', space=vmem, size = 0x20000, scoped, tag = 'output window, operand 0']
    #allocation4 [shape = 's32[2]{0}', space=sflag, size = 0x8, scoped, tag = 'scoped memory for tpu_custom_call.1']
    %9 = vsyncpa [#allocation4], 0
    %s10 = scalar_lea.sflag [#allocation4], 1
    %11 = vsyncpa %s10, 0
    loop: start=0, step=1, limit=4
    $region2: #{tpu_custom_call.1} parent=1 // loop_pre_header
      _
    $region3: #{tpu_custom_call.1} parent=1 // loop_header
      %s13 = sphi 0, %s17
      %p14 = scmp.ge.s32.totalorder %s13, 4
      %s20 = sphi 0, %s39
      %s21 = sphi 0, %s35
      %s22 = sphi 0, %s31
      %s23 = sphi 0, %s20
      %s24 = sphi 0, %s21
      %s25 = sphi 0, %s22
      %s26 = sphi 0, %s23
      %s27 = sphi 0, %s24
      %s28 = sphi 0, %s25
      %s44 = sphi 0, %s46
      %s47 = sphi 0, %s44
      %s48 = sphi 0, %s47
      %s64 = sphi 0, %s48
      %s70 = sphi 0, %s72
      %s73 = sphi 0, %s70
      %s74 = sphi 0, %s73
      %s90 = sphi 0, %s74
      %s96 = sphi 0, %s98
      %s99 = sphi 0, %s96
      %s100 = sphi 0, %s99
      %s116 = sphi 0, %s100
      %s122 = sphi 0, %s124
      %s125 = sphi 0, %s122
      %s126 = sphi 0, %s125
      %s142 = sphi 0, %s126
      %s152 = sphi 0, %s154
      %s155 = sphi 0, %s152
      %s156 = sphi 0, %s155
      %s172 = sphi 0, %s156
    $region4: #{tpu_custom_call.1} parent=1 // loop_header_branch
      %16 = sbr.rel (%p14) target = $region8
    $region5: #{tpu_custom_call.1} parent=1 // loop_body
      %s18 = ssub.s32 %s13, 1
      %s19 = ssub.s32 %s13, 2
      %s29 = sadd.s32 1, %s22
      %p30 = scmp.ge.s32.totalorder %s29, 1
      %s31 = scalar_select %p30, 0, %s29
      %s32 = sadd.s32 1, %s21
      %s33 = scalar_select %p30, %s32, %s21
      %p34 = scmp.ge.s32.totalorder %s33, 1
      %s35 = scalar_select %p34, 0, %s33
      %s36 = sadd.s32 1, %s20
      %s37 = scalar_select %p34, %s36, %s20
      %p38 = scmp.ge.s32.totalorder %s37, 2
      %s39 = scalar_select %p38, 0, %s37
      %s40 = sadd.s32 %s20, %s21
      %s41 = sadd.s32 %s39, %s35
      %s42 = ssub.s32 %s40, %s41
      %p43 = scmp.eq.s32.totalorder %s42, 0
      %s45 = sadd.s32 %s44, 1
      %s46 = scalar_select %p43, %s44, %s45
      %p49 = pneg %p43
      %p50 = scmp.eq.s32.totalorder %s13, 1
      %p51 = por %p49, %p50
      %p52 = scmp.ne.s32.totalorder %s44, %s47
      %p53 = scmp.eq.s32.totalorder %s13, 0
      %p54 = por %p52, %p53
      %p55 = scmp.ne.s32.totalorder %s44, %s47
      %p56 = scmp.eq.s32.totalorder %s18, 1
      %p57 = por %p55, %p56
      %p58 = scmp.ne.s32.totalorder %s47, %s48
      %p59 = scmp.eq.s32.totalorder %s18, 0
      %p60 = por %p58, %p59
      %p61 = scmp.ne.s32.totalorder %s47, %s48
      %p62 = scmp.eq.s32.totalorder %s19, 1
      %p63 = por %p61, %p62
      %p65 = scmp.ne.s32.totalorder %s48, %s64
      %p66 = scmp.eq.s32.totalorder %s19, 0
      %p67 = por %p65, %p66
      %s68 = ssub.s32 %s22, %s31
      %p69 = scmp.eq.s32.totalorder %s68, 0
      %s71 = sadd.s32 %s70, 1
      %s72 = scalar_select %p69, %s70, %s71
      %p75 = pneg %p69
      %p76 = scmp.eq.s32.totalorder %s13, 1
      %p77 = por %p75, %p76
      %p78 = scmp.ne.s32.totalorder %s70, %s73
      %p79 = scmp.eq.s32.totalorder %s13, 0
      %p80 = por %p78, %p79
      %p81 = scmp.ne.s32.totalorder %s70, %s73
      %p82 = scmp.eq.s32.totalorder %s18, 1
      %p83 = por %p81, %p82
      %p84 = scmp.ne.s32.totalorder %s73, %s74
      %p85 = scmp.eq.s32.totalorder %s18, 0
      %p86 = por %p84, %p85
      %p87 = scmp.ne.s32.totalorder %s73, %s74
      %p88 = scmp.eq.s32.totalorder %s19, 1
      %p89 = por %p87, %p88
      %p91 = scmp.ne.s32.totalorder %s74, %s90
      %p92 = scmp.eq.s32.totalorder %s19, 0
      %p93 = por %p91, %p92
      %s94 = ssub.s32 %s22, %s31
      %p95 = scmp.eq.s32.totalorder %s94, 0
      %s97 = sadd.s32 %s96, 1
      %s98 = scalar_select %p95, %s96, %s97
      %p101 = pneg %p95
      %p102 = scmp.eq.s32.totalorder %s13, 1
      %p103 = por %p101, %p102
      %p104 = scmp.ne.s32.totalorder %s96, %s99
      %p105 = scmp.eq.s32.totalorder %s13, 0
      %p106 = por %p104, %p105
      %p107 = scmp.ne.s32.totalorder %s96, %s99
      %p108 = scmp.eq.s32.totalorder %s18, 1
      %p109 = por %p107, %p108
      %p110 = scmp.ne.s32.totalorder %s99, %s100
      %p111 = scmp.eq.s32.totalorder %s18, 0
      %p112 = por %p110, %p111
      %p113 = scmp.ne.s32.totalorder %s99, %s100
      %p114 = scmp.eq.s32.totalorder %s19, 1
      %p115 = por %p113, %p114
      %p117 = scmp.ne.s32.totalorder %s100, %s116
      %p118 = scmp.eq.s32.totalorder %s19, 0
      %p119 = por %p117, %p118
      %s120 = ssub.s32 %s22, %s31
      %p121 = scmp.eq.s32.totalorder %s120, 0
      %s123 = sadd.s32 %s122, 1
      %s124 = scalar_select %p121, %s122, %s123
      %p127 = pneg %p121
      %p128 = scmp.eq.s32.totalorder %s13, 1
      %p129 = por %p127, %p128
      %p130 = scmp.ne.s32.totalorder %s122, %s125
      %p131 = scmp.eq.s32.totalorder %s13, 0
      %p132 = por %p130, %p131
      %p133 = scmp.ne.s32.totalorder %s122, %s125
      %p134 = scmp.eq.s32.totalorder %s18, 1
      %p135 = por %p133, %p134
      %p136 = scmp.ne.s32.totalorder %s125, %s126
      %p137 = scmp.eq.s32.totalorder %s18, 0
      %p138 = por %p136, %p137
      %p139 = scmp.ne.s32.totalorder %s125, %s126
      %p140 = scmp.eq.s32.totalorder %s19, 1
      %p141 = por %p139, %p140
      %p143 = scmp.ne.s32.totalorder %s126, %s142
      %p144 = scmp.eq.s32.totalorder %s19, 0
      %p145 = por %p143, %p144
      %s146 = sadd.s32 %s20, %s21
      %s147 = sadd.s32 %s39, %s35
      %s148 = ssub.s32 %s146, %s147
      %s149 = ssub.s32 %s22, %s31
      %s150 = sor.u32 %s148, %s149
      %p151 = scmp.eq.s32.totalorder %s150, 0
      %s153 = sadd.s32 %s152, 1
      %s154 = scalar_select %p151, %s152, %s153
      %p157 = pneg %p151
      %p158 = scmp.eq.s32.totalorder %s13, 1
      %p159 = por %p157, %p158
      %p160 = scmp.ne.s32.totalorder %s152, %s155
      %p161 = scmp.eq.s32.totalorder %s13, 0
      %p162 = por %p160, %p161
      %p163 = scmp.ne.s32.totalorder %s152, %s155
      %p164 = scmp.eq.s32.totalorder %s18, 1
      %p165 = por %p163, %p164
      %p166 = scmp.ne.s32.totalorder %s155, %s156
      %p167 = scmp.eq.s32.totalorder %s18, 0
      %p168 = por %p166, %p167
      %p169 = scmp.ne.s32.totalorder %s155, %s156
      %p170 = scmp.eq.s32.totalorder %s19, 1
      %p171 = por %p169, %p170
      %p173 = scmp.ne.s32.totalorder %s156, %s172
      %p174 = scmp.eq.s32.totalorder %s19, 0
      %p175 = por %p173, %p174
      %p176 = scmp.le.s32.totalorder 1, %s13
      %p177 = scmp.lt.s32.totalorder %s13, 3
      %p178 = pnand %p176, %p177
      %p179 = pneg %p178
      // Predicated region
      $region9: #{tpu_custom_call.1} parent=5 // pred_check
        _
      $region10: #{tpu_custom_call.1} parent=5 // pred_check_branch
        %181 = sbr.rel (%p178) target = $region12
      $region11: #{tpu_custom_call.1} parent=5 // pred_region
        %s182 = ssub.s32 %s13, 1
        // Predicated region
        $region13: #{tpu_custom_call.1} parent=11 // pred_check
          %p183 = pneg %p86
        $region14: #{tpu_custom_call.1} parent=11 // pred_check_branch
          %185 = sbr.rel (%p183) target = $region16
        $region15: #{tpu_custom_call.1} parent=11 // pred_region
          %p186 = scmp.lt.s32.totalorder %s25, 0
          %s187 = scalar_select %p186, %s25, 0
          %s188 = smul.addr %s187, 8
          %s189 = scalar_lea.vmem %s1, %s188
        $region16: #{tpu_custom_call.1} parent=11 // pred_fallthru
          _
        // Predicated region
        $region17: #{tpu_custom_call.1} parent=11 // pred_check
          %p190 = pneg %p112
        $region18: #{tpu_custom_call.1} parent=11 // pred_check_branch
          %192 = sbr.rel (%p190) target = $region20
        $region19: #{tpu_custom_call.1} parent=11 // pred_region
          %p193 = scmp.lt.s32.totalorder %s25, 0
          %s194 = scalar_select %p193, %s25, 0
          %s195 = smul.addr %s194, 8
          %s196 = scalar_lea.vmem %s2, %s195
        $region20: #{tpu_custom_call.1} parent=11 // pred_fallthru
          _
        // Predicated region
        $region21: #{tpu_custom_call.1} parent=11 // pred_check
          %p197 = pneg %p138
        $region22: #{tpu_custom_call.1} parent=11 // pred_check_branch
          %199 = sbr.rel (%p197) target = $region24
        $region23: #{tpu_custom_call.1} parent=11 // pred_region
          %p200 = scmp.lt.s32.totalorder %s25, 0
          %s201 = scalar_select %p200, %s25, 0
          %s202 = scalar_lea.vmem %s3, %s201
        $region24: #{tpu_custom_call.1} parent=11 // pred_fallthru
          _
      $region12: #{tpu_custom_call.1} parent=5 // pred_fallthru
        _
      %p203 = scmp.lt.s32.totalorder %s13, 2
      // Predicated region
      $region25: #{tpu_custom_call.1} parent=5 // pred_check
        %p204 = pneg %p203
      $region26: #{tpu_custom_call.1} parent=5 // pred_check_branch
        %206 = sbr.rel (%p204) target = $region28
      $region27: #{tpu_custom_call.1} parent=5 // pred_region
        // Predicated region
        $region29: #{tpu_custom_call.1} parent=27 // pred_check
          %p207 = pneg %p54
        $region30: #{tpu_custom_call.1} parent=27 // pred_check_branch
          %209 = sbr.rel (%p207) target = $region32
        $region31: #{tpu_custom_call.1} parent=27 // pred_region
          %s210 = sadd.s32 %s20, %s21
          %s211 = smul.u32 9, %s210
          %p212 = scmp.lt.s32.totalorder %s211, 17
          %s213 = scalar_select %p212, %s211, 17
          %s214 = smul.addr %s213, 4
          %s215 = smul.addr %s214, 8
          %s216 = scalar_lea.vmem %s0, %s215
          %s217 = sadd.s32 %s20, %s21
          %s218 = smul.u32 9, %s217
        $region32: #{tpu_custom_call.1} parent=27 // pred_fallthru
          _
      $region28: #{tpu_custom_call.1} parent=5 // pred_fallthru
        _
      %p219 = scmp.le.s32.totalorder 1, %s13
      %p220 = scmp.lt.s32.totalorder %s13, 3
      %p221 = pnand %p219, %p220
      %p222 = pneg %p221
      // Predicated region
      $region33: #{tpu_custom_call.1} parent=5 // pred_check
        _
      $region34: #{tpu_custom_call.1} parent=5 // pred_check_branch
        %224 = sbr.rel (%p221) target = $region36
      $region35: #{tpu_custom_call.1} parent=5 // pred_region
        %s225 = ssub.s32 %s13, 1
        %s226 = sadd.s32 %s23, %s24
        %s227 = smul.u32 9, %s226
        %p228 = scmp.lt.s32.totalorder %s227, 17
        %s229 = scalar_select %p228, %s227, 17
        %s230 = smul.addr %s229, 4
        %s231 = smul.addr %s230, 8
        %s232 = scalar_lea.vmem %s0, %s231
        %p233 = pneg %p60
        %p234 = pneg %p57
        %p235 = scmp.lt.s32.totalorder %s25, 0
        %s236 = scalar_select %p235, %s25, 0
        %s237 = smul.addr %s236, 8
        %s238 = scalar_lea.vmem %s1, %s237
        %p239 = pneg %p86
        %p240 = pneg %p83
        %p241 = scmp.lt.s32.totalorder %s25, 0
        %s242 = scalar_select %p241, %s25, 0
        %s243 = smul.addr %s242, 8
        %s244 = scalar_lea.vmem %s2, %s243
        %p245 = pneg %p112
        %p246 = pneg %p109
        %p247 = scmp.lt.s32.totalorder %s25, 0
        %s248 = scalar_select %p247, %s25, 0
        %s249 = scalar_lea.vmem %s3, %s248
        %p250 = pneg %p138
        %p251 = pneg %p135
        %p252 = pneg %p168
        %p253 = pneg %p165
        %s254 = sand.u32 %s155, 1
        %s255 = scalar_lea.sflag [#allocation4], %s254
        %s256 = sand.u32 %s155, 1
        %s257 = smul.addr %s256, 128
        %s258 = scalar_lea.vmem [#allocation3], %s257
        %s259 = sadd.s32 %s23, %s24
        %s260 = smul.u32 9, %s259
        %p261 = scmp.lt.s32.totalorder %s260, 17
        %s262 = scalar_select %p261, %s260, 17
        %s263 = smul.addr %s262, 4
        %s264 = smul.addr %s263, 8
        %s265 = scalar_lea.vmem %s0, %s264
        %s266 = sadd.s32 %s23, %s24
        %s267 = smul.u32 9, %s266
        %p268 = scmp.lt.s32.totalorder %s25, 0
        %s269 = scalar_select %p268, %s25, 0
        %s270 = smul.addr %s269, 8
        %s271 = scalar_lea.vmem %s1, %s270
        %p272 = scmp.lt.s32.totalorder %s25, 0
        %s273 = scalar_select %p272, %s25, 0
        %s274 = smul.addr %s273, 8
        %s275 = scalar_lea.vmem %s2, %s274
        %p276 = scmp.lt.s32.totalorder %s25, 0
        %s277 = scalar_select %p276, %s25, 0
        %s278 = scalar_lea.vmem %s3, %s277
        %s279 = sadd.s32 %s23, %s24
        %s280 = smul.u32 16, %s279
        %v281 = vld [vmem:[%s265] sm:$0xff]
        %v282 = vld [vmem:[%s265 + $0x8] sm:$0xff]
        %v283 = vld [vmem:[%s265 + $0x20] sm:$0xff]
        %v284 = vld [vmem:[%s265 + $0x28] sm:$0xff]
        %v285 = vld [vmem:[%s265 + $0x40] sm:$0xff]
        %v286 = vld [vmem:[%s265 + $0x48] sm:$0xff]
        %v287 = vld [vmem:[%s265 + $0x60] sm:$0xff]
        %v288 = vld [vmem:[%s265 + $0x68] sm:$0xff]
        %v289 = vld [vmem:[%s265 + $0x80] sm:$0xff]
        %v290 = vld [vmem:[%s265 + $0x88] sm:$0xff]
        %v291 = vld [vmem:[%s265 + $0xa0] sm:$0xff]
        %v292 = vld [vmem:[%s265 + $0xa8] sm:$0xff]
        %v293 = vld [vmem:[%s265 + $0xc0] sm:$0xff]
        %v294 = vld [vmem:[%s265 + $0xc8] sm:$0xff]
        %v295 = vld [vmem:[%s265 + $0xe0] sm:$0xff]
        %v296 = vld [vmem:[%s265 + $0xe8] sm:$0xff]
        %v297 = vld [vmem:[%s271] sm:$0xff]
        %v298 = vld [vmem:[%s275] sm:$0xff]
        %s299 = scalar_lea.vmem %s265, 16
        %v300 = vld [vmem:[%s299] sm:$0xff]
        %v301 = vld [vmem:[%s299 + $0x8] sm:$0xff]
        %v302 = vld [vmem:[%s299 + $0x20] sm:$0xff]
        %v303 = vld [vmem:[%s299 + $0x28] sm:$0xff]
        %v304 = vld [vmem:[%s299 + $0x40] sm:$0xff]
        %v305 = vld [vmem:[%s299 + $0x48] sm:$0xff]
        %v306 = vld [vmem:[%s299 + $0x60] sm:$0xff]
        %v307 = vld [vmem:[%s299 + $0x68] sm:$0xff]
        %v308 = vld [vmem:[%s299 + $0x80] sm:$0xff]
        %v309 = vld [vmem:[%s299 + $0x88] sm:$0xff]
        %v310 = vld [vmem:[%s299 + $0xa0] sm:$0xff]
        %v311 = vld [vmem:[%s299 + $0xa8] sm:$0xff]
        %v312 = vld [vmem:[%s299 + $0xc0] sm:$0xff]
        %v313 = vld [vmem:[%s299 + $0xc8] sm:$0xff]
        %v314 = vld [vmem:[%s299 + $0xe0] sm:$0xff]
        %v315 = vld [vmem:[%s299 + $0xe8] sm:$0xff]
        %s316 = scalar_lea.vmem %s271, 8
        %v317 = vld [vmem:[%s316] sm:$0xff]
        %vm318 = vcmask 64512
        %v320 = vsel %vm318, %v300, 0
        %v323 = vsel %vm318, %v301, 0
        %v326 = vsel %vm318, %v302, 0
        %v329 = vsel %vm318, %v303, 0
        %v332 = vsel %vm318, %v304, 0
        %v335 = vsel %vm318, %v305, 0
        %v338 = vsel %vm318, %v306, 0
        %v341 = vsel %vm318, %v307, 0
        %v344 = vsel %vm318, %v308, 0
        %v347 = vsel %vm318, %v309, 0
        %v350 = vsel %vm318, %v310, 0
        %v353 = vsel %vm318, %v311, 0
        %v356 = vsel %vm318, %v312, 0
        %v359 = vsel %vm318, %v313, 0
        %v362 = vsel %vm318, %v314, 0
        %v365 = vsel %vm318, %v315, 0
        %367 = vmatprep.subr.mxu0 0.0
        %368 = vmatpush1.msra.mxu0 %v317
        %369 = vmatprep.subr.mxu0 0.0
        %370 = vmatpush1.msra.mxu0 0.0
        %371 = vmatprep.subr.mxu0 0.0
        %372 = vmatpush1.msra.mxu0 0.0
        %373 = vmatprep.subr.mxu0 0.0
        %374 = vmatpush1.msra.mxu0 0.0
        %375 = vmatprep.subr.mxu0 0.0
        %376 = vmatpush1.msra.mxu0 0.0
        %377 = vmatprep.subr.mxu0 0.0
        %378 = vmatpush1.msra.mxu0 0.0
        %379 = vmatprep.subr.mxu0 0.0
        %380 = vmatpush1.msra.mxu0 0.0
        %381 = vmatprep.subr.mxu0 0.0
        %382 = vmatpush1.msra.mxu0 0.0
        %383 = vmatprep.subr.mxu0 0.0
        %384 = vmatpush1.msra.mxu0 0.0
        %385 = vmatprep.subr.mxu0 0.0
        %386 = vmatpush1.msra.mxu0 0.0
        %387 = vmatprep.subr.mxu0 0.0
        %388 = vmatpush1.msra.mxu0 0.0
        %389 = vmatprep.subr.mxu0 0.0
        %390 = vmatpush1.msra.mxu0 0.0
        %391 = vmatprep.subr.mxu0 0.0
        %392 = vmatpush1.msra.mxu0 0.0
        %393 = vmatprep.subr.mxu0 0.0
        %394 = vmatpush1.msra.mxu0 0.0
        %395 = vmatprep.subr.mxu0 0.0
        %396 = vmatpush1.msra.mxu0 0.0
        %397 = vmatprep.subr.mxu0 0.0
        %398 = vmatpush1.msra.mxu0 0.0
        %399 = vmatprep.subr.mxu0 0.0
        %400 = vmatpush1.msra.mxu0 0.0
        %401 = vmatprep.subr.mxu0 0.0
        %402 = vmatpush1.msra.mxu0 0.0
        %403 = vmatprep.subr.mxu0 0.0
        %404 = vmatpush1.msra.mxu0 0.0
        %405 = vmatprep.subr.mxu0 0.0
        %406 = vmatpush1.msra.mxu0 0.0
        %407 = vmatprep.subr.mxu0 0.0
        %408 = vmatpush1.msra.mxu0 0.0
        %409 = vmatprep.subr.mxu0 0.0
        %410 = vmatpush1.msra.mxu0 0.0
        %411 = vmatprep.subr.mxu0 0.0
        %412 = vmatpush1.msra.mxu0 0.0
        %413 = vmatprep.subr.mxu0 0.0
        %414 = vmatpush1.msra.mxu0 0.0
        %415 = vmatprep.subr.mxu0 0.0
        %416 = vmatpush1.msra.mxu0 0.0
        %417 = vmatprep.subr.mxu0 0.0
        %418 = vmatpush1.msra.mxu0 0.0
        %419 = vmatprep.subr.mxu0 0.0
        %420 = vmatpush1.msra.mxu0 0.0
        %421 = vmatprep.subr.mxu0 0.0
        %422 = vmatpush1.msra.mxu0 0.0
        %423 = vmatprep.subr.mxu0 0.0
        %424 = vmatpush1.msra.mxu0 0.0
        %425 = vmatprep.subr.mxu0 0.0
        %426 = vmatpush1.msra.mxu0 0.0
        %427 = vmatprep.subr.mxu0 0.0
        %428 = vmatpush1.msra.mxu0 0.0
        %429 = vmatprep.subr.mxu0 0.0
        %430 = vmatpush1.msra.mxu0 0.0
        %431 = vmatprep.mubr.f32.mxu0 0.0
        %432 = vmatmul.mubr.f32.gmra.mrb[0].mxu0 %v320
        %v433 = vpop.f32.mrb[0].mxu0
        %v434 = vadd.f32 0.0, %v433
        %v435 = vpop.f32.mrb[0].mxu0
        %436 = vmatprep.mubr.f32.mxu0 0.0
        %437 = vmatmul.mubr.f32.gmra.mrb[0].mxu0 %v323
        %v438 = vpop.f32.mrb[0].mxu0
        %v439 = vadd.f32 0.0, %v438
        %v440 = vpop.f32.mrb[0].mxu0
        %441 = vmatprep.mubr.f32.mxu0 0.0
        %442 = vmatmul.mubr.f32.gmra.mrb[0].mxu0 %v326
        %v443 = vpop.f32.mrb[0].mxu0
        %v444 = vadd.f32 0.0, %v443
        %v445 = vpop.f32.mrb[0].mxu0
        %446 = vmatprep.mubr.f32.mxu0 0.0
        %447 = vmatmul.mubr.f32.gmra.mrb[0].mxu0 %v329
        %v448 = vpop.f32.mrb[0].mxu0
        %v449 = vadd.f32 0.0, %v448
        %v450 = vpop.f32.mrb[0].mxu0
        %451 = vmatprep.mubr.f32.mxu0 0.0
        %452 = vmatmul.mubr.f32.gmra.mrb[0].mxu0 %v332
        %v453 = vpop.f32.mrb[0].mxu0
        %v454 = vadd.f32 0.0, %v453
        %v455 = vpop.f32.mrb[0].mxu0
        %456 = vmatprep.mubr.f32.mxu0 0.0
        %457 = vmatmul.mubr.f32.gmra.mrb[0].mxu0 %v335
        %v458 = vpop.f32.mrb[0].mxu0
        %v459 = vadd.f32 0.0, %v458
        %v460 = vpop.f32.mrb[0].mxu0
        %461 = vmatprep.mubr.f32.mxu0 0.0
        %462 = vmatmul.mubr.f32.gmra.mrb[0].mxu0 %v338
        %v463 = vpop.f32.mrb[0].mxu0
        %v464 = vadd.f32 0.0, %v463
        %v465 = vpop.f32.mrb[0].mxu0
        %466 = vmatprep.mubr.f32.mxu0 0.0
        %467 = vmatmul.mubr.f32.gmra.mrb[0].mxu0 %v341
        %v468 = vpop.f32.mrb[0].mxu0
        %v469 = vadd.f32 0.0, %v468
        %v470 = vpop.f32.mrb[0].mxu0
        %471 = vmatprep.mubr.f32.mxu0 0.0
        %472 = vmatmul.mubr.f32.gmra.mrb[0].mxu0 %v344
        %v473 = vpop.f32.mrb[0].mxu0
        %v474 = vadd.f32 0.0, %v473
        %v475 = vpop.f32.mrb[0].mxu0
        %476 = vmatprep.mubr.f32.mxu0 0.0
        %477 = vmatmul.mubr.f32.gmra.mrb[0].mxu0 %v347
        %v478 = vpop.f32.mrb[0].mxu0
        %v479 = vadd.f32 0.0, %v478
        %v480 = vpop.f32.mrb[0].mxu0
        %481 = vmatprep.mubr.f32.mxu0 0.0
        %482 = vmatmul.mubr.f32.gmra.mrb[0].mxu0 %v350
        %v483 = vpop.f32.mrb[0].mxu0
        %v484 = vadd.f32 0.0, %v483
        %v485 = vpop.f32.mrb[0].mxu0
        %486 = vmatprep.mubr.f32.mxu0 0.0
        %487 = vmatmul.mubr.f32.gmra.mrb[0].mxu0 %v353
        %v488 = vpop.f32.mrb[0].mxu0
        %v489 = vadd.f32 0.0, %v488
        %v490 = vpop.f32.mrb[0].mxu0
        %491 = vmatprep.mubr.f32.mxu0 0.0
        %492 = vmatmul.mubr.f32.gmra.mrb[0].mxu0 %v356
        %v493 = vpop.f32.mrb[0].mxu0
        %v494 = vadd.f32 0.0, %v493
        %v495 = vpop.f32.mrb[0].mxu0
        %496 = vmatprep.mubr.f32.mxu0 0.0
        %497 = vmatmul.mubr.f32.gmra.mrb[0].mxu0 %v359
        %v498 = vpop.f32.mrb[0].mxu0
        %v499 = vadd.f32 0.0, %v498
        %v500 = vpop.f32.mrb[0].mxu0
        %501 = vmatprep.mubr.f32.mxu0 0.0
        %502 = vmatmul.mubr.f32.gmra.mrb[0].mxu0 %v362
        %v503 = vpop.f32.mrb[0].mxu0
        %v504 = vadd.f32 0.0, %v503
        %v505 = vpop.f32.mrb[0].mxu0
        %506 = vmatprep.mubr.f32.mxu0 0.0
        %507 = vmatmul.mubr.f32.gmra.mrb[0].mxu0 %v365
        %v508 = vpop.f32.mrb[0].mxu0
        %v509 = vadd.f32 0.0, %v508
        %v510 = vpop.f32.mrb[0].mxu0
        %511 = vdwg.mxu0
        %v513 = vsel %vm318, %v281, 0
        %v516 = vsel %vm318, %v282, 0
        %v519 = vsel %vm318, %v283, 0
        %v522 = vsel %vm318, %v284, 0
        %v525 = vsel %vm318, %v285, 0
        %v528 = vsel %vm318, %v286, 0
        %v531 = vsel %vm318, %v287, 0
        %v534 = vsel %vm318, %v288, 0
        %v537 = vsel %vm318, %v289, 0
        %v540 = vsel %vm318, %v290, 0
        %v543 = vsel %vm318, %v291, 0
        %v546 = vsel %vm318, %v292, 0
        %v549 = vsel %vm318, %v293, 0
        %v552 = vsel %vm318, %v294, 0
        %v555 = vsel %vm318, %v295, 0
        %v558 = vsel %vm318, %v296, 0
        %560 = vmatprep.subr.mxu0 0.0
        %561 = vmatpush1.msra.mxu0 %v297
        %562 = vmatprep.subr.mxu0 0.0
        %563 = vmatpush1.msra.mxu0 0.0
        %564 = vmatprep.subr.mxu0 0.0
        %565 = vmatpush1.msra.mxu0 0.0
        %566 = vmatprep.subr.mxu0 0.0
        %567 = vmatpush1.msra.mxu0 0.0
        %568 = vmatprep.subr.mxu0 0.0
        %569 = vmatpush1.msra.mxu0 0.0
        %570 = vmatprep.subr.mxu0 0.0
        %571 = vmatpush1.msra.mxu0 0.0
        %572 = vmatprep.subr.mxu0 0.0
        %573 = vmatpush1.msra.mxu0 0.0
        %574 = vmatprep.subr.mxu0 0.0
        %575 = vmatpush1.msra.mxu0 0.0
        %576 = vmatprep.subr.mxu0 0.0
        %577 = vmatpush1.msra.mxu0 0.0
        %578 = vmatprep.subr.mxu0 0.0
        %579 = vmatpush1.msra.mxu0 0.0
        %580 = vmatprep.subr.mxu0 0.0
        %581 = vmatpush1.msra.mxu0 0.0
        %582 = vmatprep.subr.mxu0 0.0
        %583 = vmatpush1.msra.mxu0 0.0
        %584 = vmatprep.subr.mxu0 0.0
        %585 = vmatpush1.msra.mxu0 0.0
        %586 = vmatprep.subr.mxu0 0.0
        %587 = vmatpush1.msra.mxu0 0.0
        %588 = vmatprep.subr.mxu0 0.0
        %589 = vmatpush1.msra.mxu0 0.0
        %590 = vmatprep.subr.mxu0 0.0
        %591 = vmatpush1.msra.mxu0 0.0
        %592 = vmatprep.subr.mxu0 0.0
        %593 = vmatpush1.msra.mxu0 0.0
        %594 = vmatprep.subr.mxu0 0.0
        %595 = vmatpush1.msra.mxu0 0.0
        %596 = vmatprep.subr.mxu0 0.0
        %597 = vmatpush1.msra.mxu0 0.0
        %598 = vmatprep.subr.mxu0 0.0
        %599 = vmatpush1.msra.mxu0 0.0
        %600 = vmatprep.subr.mxu0 0.0
        %601 = vmatpush1.msra.mxu0 0.0
        %602 = vmatprep.subr.mxu0 0.0
        %603 = vmatpush1.msra.mxu0 0.0
        %604 = vmatprep.subr.mxu0 0.0
        %605 = vmatpush1.msra.mxu0 0.0
        %606 = vmatprep.subr.mxu0 0.0
        %607 = vmatpush1.msra.mxu0 0.0
        %608 = vmatprep.subr.mxu0 0.0
        %609 = vmatpush1.msra.mxu0 0.0
        %610 = vmatprep.subr.mxu0 0.0
        %611 = vmatpush1.msra.mxu0 0.0
        %612 = vmatprep.subr.mxu0 0.0
        %613 = vmatpush1.msra.mxu0 0.0
        %614 = vmatprep.subr.mxu0 0.0
        %615 = vmatpush1.msra.mxu0 0.0
        %616 = vmatprep.subr.mxu0 0.0
        %617 = vmatpush1.msra.mxu0 0.0
        %618 = vmatprep.subr.mxu0 0.0
        %619 = vmatpush1.msra.mxu0 0.0
        %620 = vmatprep.subr.mxu0 0.0
        %621 = vmatpush1.msra.mxu0 0.0
        %622 = vmatprep.subr.mxu0 0.0
        %623 = vmatpush1.msra.mxu0 0.0
        %624 = vmatprep.mubr.f32.mxu0 0.0
        %625 = vmatmul.mubr.f32.gmra.mrb[0].mxu0 %v513
        %v626 = vpop.f32.mrb[0].mxu0
        %v627 = vadd.f32 %v434, %v626
        %v628 = vpop.f32.mrb[0].mxu0
        %629 = vmatprep.mubr.f32.mxu0 0.0
        %630 = vmatmul.mubr.f32.gmra.mrb[0].mxu0 %v516
        %v631 = vpop.f32.mrb[0].mxu0
        %v632 = vadd.f32 %v439, %v631
        %v633 = vpop.f32.mrb[0].mxu0
        %634 = vmatprep.mubr.f32.mxu0 0.0
        %635 = vmatmul.mubr.f32.gmra.mrb[0].mxu0 %v519
        %v636 = vpop.f32.mrb[0].mxu0
        %v637 = vadd.f32 %v444, %v636
        %v638 = vpop.f32.mrb[0].mxu0
        %639 = vmatprep.mubr.f32.mxu0 0.0
        %640 = vmatmul.mubr.f32.gmra.mrb[0].mxu0 %v522
        %v641 = vpop.f32.mrb[0].mxu0
        %v642 = vadd.f32 %v449, %v641
        %v643 = vpop.f32.mrb[0].mxu0
        %644 = vmatprep.mubr.f32.mxu0 0.0
        %645 = vmatmul.mubr.f32.gmra.mrb[0].mxu0 %v525
        %v646 = vpop.f32.mrb[0].mxu0
        %v647 = vadd.f32 %v454, %v646
        %v648 = vpop.f32.mrb[0].mxu0
        %649 = vmatprep.mubr.f32.mxu0 0.0
        %650 = vmatmul.mubr.f32.gmra.mrb[0].mxu0 %v528
        %v651 = vpop.f32.mrb[0].mxu0
        %v652 = vadd.f32 %v459, %v651
        %v653 = vpop.f32.mrb[0].mxu0
        %654 = vmatprep.mubr.f32.mxu0 0.0
        %655 = vmatmul.mubr.f32.gmra.mrb[0].mxu0 %v531
        %v656 = vpop.f32.mrb[0].mxu0
        %v657 = vadd.f32 %v464, %v656
        %v658 = vpop.f32.mrb[0].mxu0
        %659 = vmatprep.mubr.f32.mxu0 0.0
        %660 = vmatmul.mubr.f32.gmra.mrb[0].mxu0 %v534
        %v661 = vpop.f32.mrb[0].mxu0
        %v662 = vadd.f32 %v469, %v661
        %v663 = vpop.f32.mrb[0].mxu0
        %664 = vmatprep.mubr.f32.mxu0 0.0
        %665 = vmatmul.mubr.f32.gmra.mrb[0].mxu0 %v537
        %v666 = vpop.f32.mrb[0].mxu0
        %v667 = vadd.f32 %v474, %v666
        %v668 = vpop.f32.mrb[0].mxu0
        %669 = vmatprep.mubr.f32.mxu0 0.0
        %670 = vmatmul.mubr.f32.gmra.mrb[0].mxu0 %v540
        %v671 = vpop.f32.mrb[0].mxu0
        %v672 = vadd.f32 %v479, %v671
        %v673 = vpop.f32.mrb[0].mxu0
        %674 = vmatprep.mubr.f32.mxu0 0.0
        %675 = vmatmul.mubr.f32.gmra.mrb[0].mxu0 %v543
        %v676 = vpop.f32.mrb[0].mxu0
        %v677 = vadd.f32 %v484, %v676
        %v678 = vpop.f32.mrb[0].mxu0
        %679 = vmatprep.mubr.f32.mxu0 0.0
        %680 = vmatmul.mubr.f32.gmra.mrb[0].mxu0 %v546
        %v681 = vpop.f32.mrb[0].mxu0
        %v682 = vadd.f32 %v489, %v681
        %v683 = vpop.f32.mrb[0].mxu0
        %684 = vmatprep.mubr.f32.mxu0 0.0
        %685 = vmatmul.mubr.f32.gmra.mrb[0].mxu0 %v549
        %v686 = vpop.f32.mrb[0].mxu0
        %v687 = vadd.f32 %v494, %v686
        %v688 = vpop.f32.mrb[0].mxu0
        %689 = vmatprep.mubr.f32.mxu0 0.0
        %690 = vmatmul.mubr.f32.gmra.mrb[0].mxu0 %v552
        %v691 = vpop.f32.mrb[0].mxu0
        %v692 = vadd.f32 %v499, %v691
        %v693 = vpop.f32.mrb[0].mxu0
        %694 = vmatprep.mubr.f32.mxu0 0.0
        %695 = vmatmul.mubr.f32.gmra.mrb[0].mxu0 %v555
        %v696 = vpop.f32.mrb[0].mxu0
        %v697 = vadd.f32 %v504, %v696
        %v698 = vpop.f32.mrb[0].mxu0
        %699 = vmatprep.mubr.f32.mxu0 0.0
        %700 = vmatmul.mubr.f32.gmra.mrb[0].mxu0 %v558
        %v701 = vpop.f32.mrb[0].mxu0
        %v702 = vadd.f32 %v509, %v701
        %v703 = vpop.f32.mrb[0].mxu0
        %704 = vdwg.mxu0
        %s705 = scalar_lea.vmem %s275, 8
        %v706 = vld [vmem:[%s705] sm:$0xff]
        %707 = vmatprep.subr.mxu0 0.0
        %708 = vmatpush1.msra.mxu0 %v706
        %709 = vmatprep.subr.mxu0 0.0
        %710 = vmatpush1.msra.mxu0 0.0
        %711 = vmatprep.subr.mxu0 0.0
        %712 = vmatpush1.msra.mxu0 0.0
        %713 = vmatprep.subr.mxu0 0.0
        %714 = vmatpush1.msra.mxu0 0.0
        %715 = vmatprep.subr.mxu0 0.0
        %716 = vmatpush1.msra.mxu0 0.0
        %717 = vmatprep.subr.mxu0 0.0
        %718 = vmatpush1.msra.mxu0 0.0
        %719 = vmatprep.subr.mxu0 0.0
        %720 = vmatpush1.msra.mxu0 0.0
        %721 = vmatprep.subr.mxu0 0.0
        %722 = vmatpush1.msra.mxu0 0.0
        %723 = vmatprep.subr.mxu0 0.0
        %724 = vmatpush1.msra.mxu0 0.0
        %725 = vmatprep.subr.mxu0 0.0
        %726 = vmatpush1.msra.mxu0 0.0
        %727 = vmatprep.subr.mxu0 0.0
        %728 = vmatpush1.msra.mxu0 0.0
        %729 = vmatprep.subr.mxu0 0.0
        %730 = vmatpush1.msra.mxu0 0.0
        %731 = vmatprep.subr.mxu0 0.0
        %732 = vmatpush1.msra.mxu0 0.0
        %733 = vmatprep.subr.mxu0 0.0
        %734 = vmatpush1.msra.mxu0 0.0
        %735 = vmatprep.subr.mxu0 0.0
        %736 = vmatpush1.msra.mxu0 0.0
        %737 = vmatprep.subr.mxu0 0.0
        %738 = vmatpush1.msra.mxu0 0.0
        %739 = vmatprep.subr.mxu0 0.0
        %740 = vmatpush1.msra.mxu0 0.0
        %741 = vmatprep.subr.mxu0 0.0
        %742 = vmatpush1.msra.mxu0 0.0
        %743 = vmatprep.subr.mxu0 0.0
        %744 = vmatpush1.msra.mxu0 0.0
        %745 = vmatprep.subr.mxu0 0.0
        %746 = vmatpush1.msra.mxu0 0.0
        %747 = vmatprep.subr.mxu0 0.0
        %748 = vmatpush1.msra.mxu0 0.0
        %749 = vmatprep.subr.mxu0 0.0
        %750 = vmatpush1.msra.mxu0 0.0
        %751 = vmatprep.subr.mxu0 0.0
        %752 = vmatpush1.msra.mxu0 0.0
        %753 = vmatprep.subr.mxu0 0.0
        %754 = vmatpush1.msra.mxu0 0.0
        %755 = vmatprep.subr.mxu0 0.0
        %756 = vmatpush1.msra.mxu0 0.0
        %757 = vmatprep.subr.mxu0 0.0
        %758 = vmatpush1.msra.mxu0 0.0
        %759 = vmatprep.subr.mxu0 0.0
        %760 = vmatpush1.msra.mxu0 0.0
        %761 = vmatprep.subr.mxu0 0.0
        %762 = vmatpush1.msra.mxu0 0.0
        %763 = vmatprep.subr.mxu0 0.0
        %764 = vmatpush1.msra.mxu0 0.0
        %765 = vmatprep.subr.mxu0 0.0
        %766 = vmatpush1.msra.mxu0 0.0
        %767 = vmatprep.subr.mxu0 0.0
        %768 = vmatpush1.msra.mxu0 0.0
        %769 = vmatprep.subr.mxu0 0.0
        %770 = vmatpush1.msra.mxu0 0.0
        %771 = vmatprep.mubr.f32.mxu0 0.0
        %772 = vmatmul.mubr.f32.gmra.mrb[0].mxu0 %v320
        %v773 = vpop.f32.mrb[0].mxu0
        %v774 = vadd.f32 0.0, %v773
        %v775 = vpop.f32.mrb[0].mxu0
        %776 = vmatprep.mubr.f32.mxu0 0.0
        %777 = vmatmul.mubr.f32.gmra.mrb[0].mxu0 %v323
        %v778 = vpop.f32.mrb[0].mxu0
        %v779 = vadd.f32 0.0, %v778
        %v780 = vpop.f32.mrb[0].mxu0
        %781 = vmatprep.mubr.f32.mxu0 0.0
        %782 = vmatmul.mubr.f32.gmra.mrb[0].mxu0 %v326
        %v783 = vpop.f32.mrb[0].mxu0
        %v784 = vadd.f32 0.0, %v783
        %v785 = vpop.f32.mrb[0].mxu0
        %786 = vmatprep.mubr.f32.mxu0 0.0
        %787 = vmatmul.mubr.f32.gmra.mrb[0].mxu0 %v329
        %v788 = vpop.f32.mrb[0].mxu0
        %v789 = vadd.f32 0.0, %v788
        %v790 = vpop.f32.mrb[0].mxu0
        %791 = vmatprep.mubr.f32.mxu0 0.0
        %792 = vmatmul.mubr.f32.gmra.mrb[0].mxu0 %v332
        %v793 = vpop.f32.mrb[0].mxu0
        %v794 = vadd.f32 0.0, %v793
        %v795 = vpop.f32.mrb[0].mxu0
        %796 = vmatprep.mubr.f32.mxu0 0.0
        %797 = vmatmul.mubr.f32.gmra.mrb[0].mxu0 %v335
        %v798 = vpop.f32.mrb[0].mxu0
        %v799 = vadd.f32 0.0, %v798
        %v800 = vpop.f32.mrb[0].mxu0
        %801 = vmatprep.mubr.f32.mxu0 0.0
        %802 = vmatmul.mubr.f32.gmra.mrb[0].mxu0 %v338
        %v803 = vpop.f32.mrb[0].mxu0
        %v804 = vadd.f32 0.0, %v803
        %v805 = vpop.f32.mrb[0].mxu0
        %806 = vmatprep.mubr.f32.mxu0 0.0
        %807 = vmatmul.mubr.f32.gmra.mrb[0].mxu0 %v341
        %v808 = vpop.f32.mrb[0].mxu0
        %v809 = vadd.f32 0.0, %v808
        %v810 = vpop.f32.mrb[0].mxu0
        %811 = vmatprep.mubr.f32.mxu0 0.0
        %812 = vmatmul.mubr.f32.gmra.mrb[0].mxu0 %v344
        %v813 = vpop.f32.mrb[0].mxu0
        %v814 = vadd.f32 0.0, %v813
        %v815 = vpop.f32.mrb[0].mxu0
        %816 = vmatprep.mubr.f32.mxu0 0.0
        %817 = vmatmul.mubr.f32.gmra.mrb[0].mxu0 %v347
        %v818 = vpop.f32.mrb[0].mxu0
        %v819 = vadd.f32 0.0, %v818
        %v820 = vpop.f32.mrb[0].mxu0
        %821 = vmatprep.mubr.f32.mxu0 0.0
        %822 = vmatmul.mubr.f32.gmra.mrb[0].mxu0 %v350
        %v823 = vpop.f32.mrb[0].mxu0
        %v824 = vadd.f32 0.0, %v823
        %v825 = vpop.f32.mrb[0].mxu0
        %826 = vmatprep.mubr.f32.mxu0 0.0
        %827 = vmatmul.mubr.f32.gmra.mrb[0].mxu0 %v353
        %v828 = vpop.f32.mrb[0].mxu0
        %v829 = vadd.f32 0.0, %v828
        %v830 = vpop.f32.mrb[0].mxu0
        %831 = vmatprep.mubr.f32.mxu0 0.0
        %832 = vmatmul.mubr.f32.gmra.mrb[0].mxu0 %v356
        %v833 = vpop.f32.mrb[0].mxu0
        %v834 = vadd.f32 0.0, %v833
        %v835 = vpop.f32.mrb[0].mxu0
        %836 = vmatprep.mubr.f32.mxu0 0.0
        %837 = vmatmul.mubr.f32.gmra.mrb[0].mxu0 %v359
        %v838 = vpop.f32.mrb[0].mxu0
        %v839 = vadd.f32 0.0, %v838
        %v840 = vpop.f32.mrb[0].mxu0
        %841 = vmatprep.mubr.f32.mxu0 0.0
        %842 = vmatmul.mubr.f32.gmra.mrb[0].mxu0 %v362
        %v843 = vpop.f32.mrb[0].mxu0
        %v844 = vadd.f32 0.0, %v843
        %v845 = vpop.f32.mrb[0].mxu0
        %846 = vmatprep.mubr.f32.mxu0 0.0
        %847 = vmatmul.mubr.f32.gmra.mrb[0].mxu0 %v365
        %v848 = vpop.f32.mrb[0].mxu0
        %v849 = vadd.f32 0.0, %v848
        %v850 = vpop.f32.mrb[0].mxu0
        %851 = vdwg.mxu0
        %852 = vmatprep.subr.mxu0 0.0
        %853 = vmatpush1.msra.mxu0 %v298
        %854 = vmatprep.subr.mxu0 0.0
        %855 = vmatpush1.msra.mxu0 0.0
        %856 = vmatprep.subr.mxu0 0.0
        %857 = vmatpush1.msra.mxu0 0.0
        %858 = vmatprep.subr.mxu0 0.0
        %859 = vmatpush1.msra.mxu0 0.0
        %860 = vmatprep.subr.mxu0 0.0
        %861 = vmatpush1.msra.mxu0 0.0
        %862 = vmatprep.subr.mxu0 0.0
        %863 = vmatpush1.msra.mxu0 0.0
        %864 = vmatprep.subr.mxu0 0.0
        %865 = vmatpush1.msra.mxu0 0.0
        %866 = vmatprep.subr.mxu0 0.0
        %867 = vmatpush1.msra.mxu0 0.0
        %868 = vmatprep.subr.mxu0 0.0
        %869 = vmatpush1.msra.mxu0 0.0
        %870 = vmatprep.subr.mxu0 0.0
        %871 = vmatpush1.msra.mxu0 0.0
        %872 = vmatprep.subr.mxu0 0.0
        %873 = vmatpush1.msra.mxu0 0.0
        %874 = vmatprep.subr.mxu0 0.0
        %875 = vmatpush1.msra.mxu0 0.0
        %876 = vmatprep.subr.mxu0 0.0
        %877 = vmatpush1.msra.mxu0 0.0
        %878 = vmatprep.subr.mxu0 0.0
        %879 = vmatpush1.msra.mxu0 0.0
        %880 = vmatprep.subr.mxu0 0.0
        %881 = vmatpush1.msra.mxu0 0.0
        %882 = vmatprep.subr.mxu0 0.0
        %883 = vmatpush1.msra.mxu0 0.0
        %884 = vmatprep.subr.mxu0 0.0
        %885 = vmatpush1.msra.mxu0 0.0
        %886 = vmatprep.subr.mxu0 0.0
        %887 = vmatpush1.msra.mxu0 0.0
        %888 = vmatprep.subr.mxu0 0.0
        %889 = vmatpush1.msra.mxu0 0.0
        %890 = vmatprep.subr.mxu0 0.0
        %891 = vmatpush1.msra.mxu0 0.0
        %892 = vmatprep.subr.mxu0 0.0
        %893 = vmatpush1.msra.mxu0 0.0
        %894 = vmatprep.subr.mxu0 0.0
        %895 = vmatpush1.msra.mxu0 0.0
        %896 = vmatprep.subr.mxu0 0.0
        %897 = vmatpush1.msra.mxu0 0.0
        %898 = vmatprep.subr.mxu0 0.0
        %899 = vmatpush1.msra.mxu0 0.0
        %900 = vmatprep.subr.mxu0 0.0
        %901 = vmatpush1.msra.mxu0 0.0
        %902 = vmatprep.subr.mxu0 0.0
        %903 = vmatpush1.msra.mxu0 0.0
        %904 = vmatprep.subr.mxu0 0.0
        %905 = vmatpush1.msra.mxu0 0.0
        %906 = vmatprep.subr.mxu0 0.0
        %907 = vmatpush1.msra.mxu0 0.0
        %908 = vmatprep.subr.mxu0 0.0
        %909 = vmatpush1.msra.mxu0 0.0
        %910 = vmatprep.subr.mxu0 0.0
        %911 = vmatpush1.msra.mxu0 0.0
        %912 = vmatprep.subr.mxu0 0.0
        %913 = vmatpush1.msra.mxu0 0.0
        %914 = vmatprep.subr.mxu0 0.0
        %915 = vmatpush1.msra.mxu0 0.0
        %916 = vmatprep.mubr.f32.mxu0 0.0
        %917 = vmatmul.mubr.f32.gmra.mrb[0].mxu0 %v513
        %v918 = vpop.f32.mrb[0].mxu0
        %v919 = vadd.f32 %v774, %v918
        %v920 = vpop.f32.mrb[0].mxu0
        %921 = vmatprep.mubr.f32.mxu0 0.0
        %922 = vmatmul.mubr.f32.gmra.mrb[0].mxu0 %v516
        %v923 = vpop.f32.mrb[0].mxu0
        %v924 = vadd.f32 %v779, %v923
        %v925 = vpop.f32.mrb[0].mxu0
        %926 = vmatprep.mubr.f32.mxu0 0.0
        %927 = vmatmul.mubr.f32.gmra.mrb[0].mxu0 %v519
        %v928 = vpop.f32.mrb[0].mxu0
        %v929 = vadd.f32 %v784, %v928
        %v930 = vpop.f32.mrb[0].mxu0
        %931 = vmatprep.mubr.f32.mxu0 0.0
        %932 = vmatmul.mubr.f32.gmra.mrb[0].mxu0 %v522
        %v933 = vpop.f32.mrb[0].mxu0
        %v934 = vadd.f32 %v789, %v933
        %v935 = vpop.f32.mrb[0].mxu0
        %936 = vmatprep.mubr.f32.mxu0 0.0
        %937 = vmatmul.mubr.f32.gmra.mrb[0].mxu0 %v525
        %v938 = vpop.f32.mrb[0].mxu0
        %v939 = vadd.f32 %v794, %v938
        %v940 = vpop.f32.mrb[0].mxu0
        %941 = vmatprep.mubr.f32.mxu0 0.0
        %942 = vmatmul.mubr.f32.gmra.mrb[0].mxu0 %v528
        %v943 = vpop.f32.mrb[0].mxu0
        %v944 = vadd.f32 %v799, %v943
        %v945 = vpop.f32.mrb[0].mxu0
        %946 = vmatprep.mubr.f32.mxu0 0.0
        %947 = vmatmul.mubr.f32.gmra.mrb[0].mxu0 %v531
        %v948 = vpop.f32.mrb[0].mxu0
        %v949 = vadd.f32 %v804, %v948
        %v950 = vpop.f32.mrb[0].mxu0
        %951 = vmatprep.mubr.f32.mxu0 0.0
        %952 = vmatmul.mubr.f32.gmra.mrb[0].mxu0 %v534
        %v953 = vpop.f32.mrb[0].mxu0
        %v954 = vadd.f32 %v809, %v953
        %v955 = vpop.f32.mrb[0].mxu0
        %956 = vmatprep.mubr.f32.mxu0 0.0
        %957 = vmatmul.mubr.f32.gmra.mrb[0].mxu0 %v537
        %v958 = vpop.f32.mrb[0].mxu0
        %v959 = vadd.f32 %v814, %v958
        %v960 = vpop.f32.mrb[0].mxu0
        %961 = vmatprep.mubr.f32.mxu0 0.0
        %962 = vmatmul.mubr.f32.gmra.mrb[0].mxu0 %v540
        %v963 = vpop.f32.mrb[0].mxu0
        %v964 = vadd.f32 %v819, %v963
        %v965 = vpop.f32.mrb[0].mxu0
        %966 = vmatprep.mubr.f32.mxu0 0.0
        %967 = vmatmul.mubr.f32.gmra.mrb[0].mxu0 %v543
        %v968 = vpop.f32.mrb[0].mxu0
        %v969 = vadd.f32 %v824, %v968
        %v970 = vpop.f32.mrb[0].mxu0
        %971 = vmatprep.mubr.f32.mxu0 0.0
        %972 = vmatmul.mubr.f32.gmra.mrb[0].mxu0 %v546
        %v973 = vpop.f32.mrb[0].mxu0
        %v974 = vadd.f32 %v829, %v973
        %v975 = vpop.f32.mrb[0].mxu0
        %976 = vmatprep.mubr.f32.mxu0 0.0
        %977 = vmatmul.mubr.f32.gmra.mrb[0].mxu0 %v549
        %v978 = vpop.f32.mrb[0].mxu0
        %v979 = vadd.f32 %v834, %v978
        %v980 = vpop.f32.mrb[0].mxu0
        %981 = vmatprep.mubr.f32.mxu0 0.0
        %982 = vmatmul.mubr.f32.gmra.mrb[0].mxu0 %v552
        %v983 = vpop.f32.mrb[0].mxu0
        %v984 = vadd.f32 %v839, %v983
        %v985 = vpop.f32.mrb[0].mxu0
        %986 = vmatprep.mubr.f32.mxu0 0.0
        %987 = vmatmul.mubr.f32.gmra.mrb[0].mxu0 %v555
        %v988 = vpop.f32.mrb[0].mxu0
        %v989 = vadd.f32 %v844, %v988
        %v990 = vpop.f32.mrb[0].mxu0
        %991 = vmatprep.mubr.f32.mxu0 0.0
        %992 = vmatmul.mubr.f32.gmra.mrb[0].mxu0 %v558
        %v993 = vpop.f32.mrb[0].mxu0
        %v994 = vadd.f32 %v849, %v993
        %v995 = vpop.f32.mrb[0].mxu0
        %996 = vdwg.mxu0
        %s997 = scalar_lea.vmem %s265, 32
        %v998 = vld [vmem:[%s997] sm:$0xff]
        %v999 = vld [vmem:[%s997 + $0x8] sm:$0xff]
        %v1000 = vld [vmem:[%s997 + $0x20] sm:$0xff]
        %v1001 = vld [vmem:[%s997 + $0x28] sm:$0xff]
        %v1002 = vld [vmem:[%s997 + $0x40] sm:$0xff]
        %v1003 = vld [vmem:[%s997 + $0x48] sm:$0xff]
        %v1004 = vld [vmem:[%s997 + $0x60] sm:$0xff]
        %v1005 = vld [vmem:[%s997 + $0x68] sm:$0xff]
        %v1006 = vld [vmem:[%s997 + $0x80] sm:$0xff]
        %v1007 = vld [vmem:[%s997 + $0x88] sm:$0xff]
        %v1008 = vld [vmem:[%s997 + $0xa0] sm:$0xff]
        %v1009 = vld [vmem:[%s997 + $0xa8] sm:$0xff]
        %v1010 = vld [vmem:[%s997 + $0xc0] sm:$0xff]
        %v1011 = vld [vmem:[%s997 + $0xc8] sm:$0xff]
        %v1012 = vld [vmem:[%s997 + $0xe0] sm:$0xff]
        %v1013 = vld [vmem:[%s997 + $0xe8] sm:$0xff]
        %s1014 = scalar_lea.vmem %s271, 16
        %v1015 = vld [vmem:[%s1014] sm:$0xff]
        %v1017 = vsel %vm318, %v998, 0
        %v1020 = vsel %vm318, %v999, 0
        %v1023 = vsel %vm318, %v1000, 0
        %v1026 = vsel %vm318, %v1001, 0
        %v1029 = vsel %vm318, %v1002, 0
        %v1032 = vsel %vm318, %v1003, 0
        %v1035 = vsel %vm318, %v1004, 0
        %v1038 = vsel %vm318, %v1005, 0
        %v1041 = vsel %vm318, %v1006, 0
        %v1044 = vsel %vm318, %v1007, 0
        %v1047 = vsel %vm318, %v1008, 0
        %v1050 = vsel %vm318, %v1009, 0
        %v1053 = vsel %vm318, %v1010, 0
        %v1056 = vsel %vm318, %v1011, 0
        %v1059 = vsel %vm318, %v1012, 0
        %v1062 = vsel %vm318, %v1013, 0
        %1064 = vmatprep.subr.mxu0 0.0
        %1065 = vmatpush1.msra.mxu0 %v1015
        %1066 = vmatprep.subr.mxu0 0.0
        %1067 = vmatpush1.msra.mxu0 0.0
        %1068 = vmatprep.subr.mxu0 0.0
        %1069 = vmatpush1.msra.mxu0 0.0
        %1070 = vmatprep.subr.mxu0 0.0
        %1071 = vmatpush1.msra.mxu0 0.0
        %1072 = vmatprep.subr.mxu0 0.0
        %1073 = vmatpush1.msra.mxu0 0.0
        %1074 = vmatprep.subr.mxu0 0.0
        %1075 = vmatpush1.msra.mxu0 0.0
        %1076 = vmatprep.subr.mxu0 0.0
        %1077 = vmatpush1.msra.mxu0 0.0
        %1078 = vmatprep.subr.mxu0 0.0
        %1079 = vmatpush1.msra.mxu0 0.0
        %1080 = vmatprep.subr.mxu0 0.0
        %1081 = vmatpush1.msra.mxu0 0.0
        %1082 = vmatprep.subr.mxu0 0.0
        %1083 = vmatpush1.msra.mxu0 0.0
        %1084 = vmatprep.subr.mxu0 0.0
        %1085 = vmatpush1.msra.mxu0 0.0
        %1086 = vmatprep.subr.mxu0 0.0
        %1087 = vmatpush1.msra.mxu0 0.0
        %1088 = vmatprep.subr.mxu0 0.0
        %1089 = vmatpush1.msra.mxu0 0.0
        %1090 = vmatprep.subr.mxu0 0.0
        %1091 = vmatpush1.msra.mxu0 0.0
        %1092 = vmatprep.subr.mxu0 0.0
        %1093 = vmatpush1.msra.mxu0 0.0
        %1094 = vmatprep.subr.mxu0 0.0
        %1095 = vmatpush1.msra.mxu0 0.0
        %1096 = vmatprep.subr.mxu0 0.0
        %1097 = vmatpush1.msra.mxu0 0.0
        %1098 = vmatprep.subr.mxu0 0.0
        %1099 = vmatpush1.msra.mxu0 0.0
        %1100 = vmatprep.subr.mxu0 0.0
        %1101 = vmatpush1.msra.mxu0 0.0
        %1102 = vmatprep.subr.mxu0 0.0
        %1103 = vmatpush1.msra.mxu0 0.0
        %1104 = vmatprep.subr.mxu0 0.0
        %1105 = vmatpush1.msra.mxu0 0.0
        %1106 = vmatprep.subr.mxu0 0.0
        %1107 = vmatpush1.msra.mxu0 0.0
        %1108 = vmatprep.subr.mxu0 0.0
        %1109 = vmatpush1.msra.mxu0 0.0
        %1110 = vmatprep.subr.mxu0 0.0
        %1111 = vmatpush1.msra.mxu0 0.0
        %1112 = vmatprep.subr.mxu0 0.0
        %1113 = vmatpush1.msra.mxu0 0.0
        %1114 = vmatprep.subr.mxu0 0.0
        %1115 = vmatpush1.msra.mxu0 0.0
        %1116 = vmatprep.subr.mxu0 0.0
        %1117 = vmatpush1.msra.mxu0 0.0
        %1118 = vmatprep.subr.mxu0 0.0
        %1119 = vmatpush1.msra.mxu0 0.0
        %1120 = vmatprep.subr.mxu0 0.0
        %1121 = vmatpush1.msra.mxu0 0.0
        %1122 = vmatprep.subr.mxu0 0.0
        %1123 = vmatpush1.msra.mxu0 0.0
        %1124 = vmatprep.subr.mxu0 0.0
        %1125 = vmatpush1.msra.mxu0 0.0
        %1126 = vmatprep.subr.mxu0 0.0
        %1127 = vmatpush1.msra.mxu0 0.0
        %1128 = vmatprep.mubr.f32.mxu0 0.0
        %1129 = vmatmul.mubr.f32.gmra.mrb[0].mxu0 %v1017
        %v1130 = vpop.f32.mrb[0].mxu0
        %v1131 = vadd.f32 0.0, %v1130
        %v1132 = vpop.f32.mrb[0].mxu0
        %1133 = vmatprep.mubr.f32.mxu0 0.0
        %1134 = vmatmul.mubr.f32.gmra.mrb[0].mxu0 %v1020
        %v1135 = vpop.f32.mrb[0].mxu0
        %v1136 = vadd.f32 0.0, %v1135
        %v1137 = vpop.f32.mrb[0].mxu0
        %1138 = vmatprep.mubr.f32.mxu0 0.0
        %1139 = vmatmul.mubr.f32.gmra.mrb[0].mxu0 %v1023
        %v1140 = vpop.f32.mrb[0].mxu0
        %v1141 = vadd.f32 0.0, %v1140
        %v1142 = vpop.f32.mrb[0].mxu0
        %1143 = vmatprep.mubr.f32.mxu0 0.0
        %1144 = vmatmul.mubr.f32.gmra.mrb[0].mxu0 %v1026
        %v1145 = vpop.f32.mrb[0].mxu0
        %v1146 = vadd.f32 0.0, %v1145
        %v1147 = vpop.f32.mrb[0].mxu0
        %1148 = vmatprep.mubr.f32.mxu0 0.0
        %1149 = vmatmul.mubr.f32.gmra.mrb[0].mxu0 %v1029
        %v1150 = vpop.f32.mrb[0].mxu0
        %v1151 = vadd.f32 0.0, %v1150
        %v1152 = vpop.f32.mrb[0].mxu0
        %1153 = vmatprep.mubr.f32.mxu0 0.0
        %1154 = vmatmul.mubr.f32.gmra.mrb[0].mxu0 %v1032
        %v1155 = vpop.f32.mrb[0].mxu0
        %v1156 = vadd.f32 0.0, %v1155
        %v1157 = vpop.f32.mrb[0].mxu0
        %1158 = vmatprep.mubr.f32.mxu0 0.0
        %1159 = vmatmul.mubr.f32.gmra.mrb[0].mxu0 %v1035
        %v1160 = vpop.f32.mrb[0].mxu0
        %v1161 = vadd.f32 0.0, %v1160
        %v1162 = vpop.f32.mrb[0].mxu0
        %1163 = vmatprep.mubr.f32.mxu0 0.0
        %1164 = vmatmul.mubr.f32.gmra.mrb[0].mxu0 %v1038
        %v1165 = vpop.f32.mrb[0].mxu0
        %v1166 = vadd.f32 0.0, %v1165
        %v1167 = vpop.f32.mrb[0].mxu0
        %1168 = vmatprep.mubr.f32.mxu0 0.0
        %1169 = vmatmul.mubr.f32.gmra.mrb[0].mxu0 %v1041
        %v1170 = vpop.f32.mrb[0].mxu0
        %v1171 = vadd.f32 0.0, %v1170
        %v1172 = vpop.f32.mrb[0].mxu0
        %1173 = vmatprep.mubr.f32.mxu0 0.0
        %1174 = vmatmul.mubr.f32.gmra.mrb[0].mxu0 %v1044
        %v1175 = vpop.f32.mrb[0].mxu0
        %v1176 = vadd.f32 0.0, %v1175
        %v1177 = vpop.f32.mrb[0].mxu0
        %1178 = vmatprep.mubr.f32.mxu0 0.0
        %1179 = vmatmul.mubr.f32.gmra.mrb[0].mxu0 %v1047
        %v1180 = vpop.f32.mrb[0].mxu0
        %v1181 = vadd.f32 0.0, %v1180
        %v1182 = vpop.f32.mrb[0].mxu0
        %1183 = vmatprep.mubr.f32.mxu0 0.0
        %1184 = vmatmul.mubr.f32.gmra.mrb[0].mxu0 %v1050
        %v1185 = vpop.f32.mrb[0].mxu0
        %v1186 = vadd.f32 0.0, %v1185
        %v1187 = vpop.f32.mrb[0].mxu0
        %1188 = vmatprep.mubr.f32.mxu0 0.0
        %1189 = vmatmul.mubr.f32.gmra.mrb[0].mxu0 %v1053
        %v1190 = vpop.f32.mrb[0].mxu0
        %v1191 = vadd.f32 0.0, %v1190
        %v1192 = vpop.f32.mrb[0].mxu0
        %1193 = vmatprep.mubr.f32.mxu0 0.0
        %1194 = vmatmul.mubr.f32.gmra.mrb[0].mxu0 %v1056
        %v1195 = vpop.f32.mrb[0].mxu0
        %v1196 = vadd.f32 0.0, %v1195
        %v1197 = vpop.f32.mrb[0].mxu0
        %1198 = vmatprep.mubr.f32.mxu0 0.0
        %1199 = vmatmul.mubr.f32.gmra.mrb[0].mxu0 %v1059
        %v1200 = vpop.f32.mrb[0].mxu0
        %v1201 = vadd.f32 0.0, %v1200
        %v1202 = vpop.f32.mrb[0].mxu0
        %1203 = vmatprep.mubr.f32.mxu0 0.0
        %1204 = vmatmul.mubr.f32.gmra.mrb[0].mxu0 %v1062
        %v1205 = vpop.f32.mrb[0].mxu0
        %v1206 = vadd.f32 0.0, %v1205
        %v1207 = vpop.f32.mrb[0].mxu0
        %1208 = vdwg.mxu0
        %v1209 = vadd.f32 %v627, %v1131
        %v1210 = vadd.f32 %v632, %v1136
        %v1211 = vadd.f32 %v637, %v1141
        %v1212 = vadd.f32 %v642, %v1146
        %v1213 = vadd.f32 %v647, %v1151
        %v1214 = vadd.f32 %v652, %v1156
        %v1215 = vadd.f32 %v657, %v1161
        %v1216 = vadd.f32 %v662, %v1166
        %v1217 = vadd.f32 %v667, %v1171
        %v1218 = vadd.f32 %v672, %v1176
        %v1219 = vadd.f32 %v677, %v1181
        %v1220 = vadd.f32 %v682, %v1186
        %v1221 = vadd.f32 %v687, %v1191
        %v1222 = vadd.f32 %v692, %v1196
        %v1223 = vadd.f32 %v697, %v1201
        %v1224 = vadd.f32 %v702, %v1206
        %s1225 = scalar_lea.vmem %s275, 16
        %v1226 = vld [vmem:[%s1225] sm:$0xff]
        %1227 = vmatprep.subr.mxu0 0.0
        %1228 = vmatpush1.msra.mxu0 %v1226
        %1229 = vmatprep.subr.mxu0 0.0
        %1230 = vmatpush1.msra.mxu0 0.0
        %1231 = vmatprep.subr.mxu0 0.0
        %1232 = vmatpush1.msra.mxu0 0.0
        %1233 = vmatprep.subr.mxu0 0.0
        %1234 = vmatpush1.msra.mxu0 0.0
        %1235 = vmatprep.subr.mxu0 0.0
        %1236 = vmatpush1.msra.mxu0 0.0
        %1237 = vmatprep.subr.mxu0 0.0
        %1238 = vmatpush1.msra.mxu0 0.0
        %1239 = vmatprep.subr.mxu0 0.0
        %1240 = vmatpush1.msra.mxu0 0.0
        %1241 = vmatprep.subr.mxu0 0.0
        %1242 = vmatpush1.msra.mxu0 0.0
        %1243 = vmatprep.subr.mxu0 0.0
        %1244 = vmatpush1.msra.mxu0 0.0
        %1245 = vmatprep.subr.mxu0 0.0
        %1246 = vmatpush1.msra.mxu0 0.0
        %1247 = vmatprep.subr.mxu0 0.0
        %1248 = vmatpush1.msra.mxu0 0.0
        %1249 = vmatprep.subr.mxu0 0.0
        %1250 = vmatpush1.msra.mxu0 0.0
        %1251 = vmatprep.subr.mxu0 0.0
        %1252 = vmatpush1.msra.mxu0 0.0
        %1253 = vmatprep.subr.mxu0 0.0
        %1254 = vmatpush1.msra.mxu0 0.0
        %1255 = vmatprep.subr.mxu0 0.0
        %1256 = vmatpush1.msra.mxu0 0.0
        %1257 = vmatprep.subr.mxu0 0.0
        %1258 = vmatpush1.msra.mxu0 0.0
        %1259 = vmatprep.subr.mxu0 0.0
        %1260 = vmatpush1.msra.mxu0 0.0
        %1261 = vmatprep.subr.mxu0 0.0
        %1262 = vmatpush1.msra.mxu0 0.0
        %1263 = vmatprep.subr.mxu0 0.0
        %1264 = vmatpush1.msra.mxu0 0.0
        %1265 = vmatprep.subr.mxu0 0.0
        %1266 = vmatpush1.msra.mxu0 0.0
        %1267 = vmatprep.subr.mxu0 0.0
        %1268 = vmatpush1.msra.mxu0 0.0
        %1269 = vmatprep.subr.mxu0 0.0
        %1270 = vmatpush1.msra.mxu0 0.0
        %1271 = vmatprep.subr.mxu0 0.0
        %1272 = vmatpush1.msra.mxu0 0.0
        %1273 = vmatprep.subr.mxu0 0.0
        %1274 = vmatpush1.msra.mxu0 0.0
        %1275 = vmatprep.subr.mxu0 0.0
        %1276 = vmatpush1.msra.mxu0 0.0
        %1277 = vmatprep.subr.mxu0 0.0
        %1278 = vmatpush1.msra.mxu0 0.0
        %1279 = vmatprep.subr.mxu0 0.0
        %1280 = vmatpush1.msra.mxu0 0.0
        %1281 = vmatprep.subr.mxu0 0.0
        %1282 = vmatpush1.msra.mxu0 0.0
        %1283 = vmatprep.subr.mxu0 0.0
        %1284 = vmatpush1.msra.mxu0 0.0
        %1285 = vmatprep.subr.mxu0 0.0
        %1286 = vmatpush1.msra.mxu0 0.0
        %1287 = vmatprep.subr.mxu0 0.0
        %1288 = vmatpush1.msra.mxu0 0.0
        %1289 = vmatprep.subr.mxu0 0.0
        %1290 = vmatpush1.msra.mxu0 0.0
        %1291 = vmatprep.mubr.f32.mxu0 0.0
        %1292 = vmatmul.mubr.f32.gmra.mrb[0].mxu0 %v1017
        %v1293 = vpop.f32.mrb[0].mxu0
        %v1294 = vadd.f32 0.0, %v1293
        %v1295 = vpop.f32.mrb[0].mxu0
        %1296 = vmatprep.mubr.f32.mxu0 0.0
        %1297 = vmatmul.mubr.f32.gmra.mrb[0].mxu0 %v1020
        %v1298 = vpop.f32.mrb[0].mxu0
        %v1299 = vadd.f32 0.0, %v1298
        %v1300 = vpop.f32.mrb[0].mxu0
        %1301 = vmatprep.mubr.f32.mxu0 0.0
        %1302 = vmatmul.mubr.f32.gmra.mrb[0].mxu0 %v1023
        %v1303 = vpop.f32.mrb[0].mxu0
        %v1304 = vadd.f32 0.0, %v1303
        %v1305 = vpop.f32.mrb[0].mxu0
        %1306 = vmatprep.mubr.f32.mxu0 0.0
        %1307 = vmatmul.mubr.f32.gmra.mrb[0].mxu0 %v1026
        %v1308 = vpop.f32.mrb[0].mxu0
        %v1309 = vadd.f32 0.0, %v1308
        %v1310 = vpop.f32.mrb[0].mxu0
        %1311 = vmatprep.mubr.f32.mxu0 0.0
        %1312 = vmatmul.mubr.f32.gmra.mrb[0].mxu0 %v1029
        %v1313 = vpop.f32.mrb[0].mxu0
        %v1314 = vadd.f32 0.0, %v1313
        %v1315 = vpop.f32.mrb[0].mxu0
        %1316 = vmatprep.mubr.f32.mxu0 0.0
        %1317 = vmatmul.mubr.f32.gmra.mrb[0].mxu0 %v1032
        %v1318 = vpop.f32.mrb[0].mxu0
        %v1319 = vadd.f32 0.0, %v1318
        %v1320 = vpop.f32.mrb[0].mxu0
        %1321 = vmatprep.mubr.f32.mxu0 0.0
        %1322 = vmatmul.mubr.f32.gmra.mrb[0].mxu0 %v1035
        %v1323 = vpop.f32.mrb[0].mxu0
        %v1324 = vadd.f32 0.0, %v1323
        %v1325 = vpop.f32.mrb[0].mxu0
        %1326 = vmatprep.mubr.f32.mxu0 0.0
        %1327 = vmatmul.mubr.f32.gmra.mrb[0].mxu0 %v1038
        %v1328 = vpop.f32.mrb[0].mxu0
        %v1329 = vadd.f32 0.0, %v1328
        %v1330 = vpop.f32.mrb[0].mxu0
        %1331 = vmatprep.mubr.f32.mxu0 0.0
        %1332 = vmatmul.mubr.f32.gmra.mrb[0].mxu0 %v1041
        %v1333 = vpop.f32.mrb[0].mxu0
        %v1334 = vadd.f32 0.0, %v1333
        %v1335 = vpop.f32.mrb[0].mxu0
        %1336 = vmatprep.mubr.f32.mxu0 0.0
        %1337 = vmatmul.mubr.f32.gmra.mrb[0].mxu0 %v1044
        %v1338 = vpop.f32.mrb[0].mxu0
        %v1339 = vadd.f32 0.0, %v1338
        %v1340 = vpop.f32.mrb[0].mxu0
        %1341 = vmatprep.mubr.f32.mxu0 0.0
        %1342 = vmatmul.mubr.f32.gmra.mrb[0].mxu0 %v1047
        %v1343 = vpop.f32.mrb[0].mxu0
        %v1344 = vadd.f32 0.0, %v1343
        %v1345 = vpop.f32.mrb[0].mxu0
        %1346 = vmatprep.mubr.f32.mxu0 0.0
        %1347 = vmatmul.mubr.f32.gmra.mrb[0].mxu0 %v1050
        %v1348 = vpop.f32.mrb[0].mxu0
        %v1349 = vadd.f32 0.0, %v1348
        %v1350 = vpop.f32.mrb[0].mxu0
        %1351 = vmatprep.mubr.f32.mxu0 0.0
        %1352 = vmatmul.mubr.f32.gmra.mrb[0].mxu0 %v1053
        %v1353 = vpop.f32.mrb[0].mxu0
        %v1354 = vadd.f32 0.0, %v1353
        %v1355 = vpop.f32.mrb[0].mxu0
        %1356 = vmatprep.mubr.f32.mxu0 0.0
        %1357 = vmatmul.mubr.f32.gmra.mrb[0].mxu0 %v1056
        %v1358 = vpop.f32.mrb[0].mxu0
        %v1359 = vadd.f32 0.0, %v1358
        %v1360 = vpop.f32.mrb[0].mxu0
        %1361 = vmatprep.mubr.f32.mxu0 0.0
        %1362 = vmatmul.mubr.f32.gmra.mrb[0].mxu0 %v1059
        %v1363 = vpop.f32.mrb[0].mxu0
        %v1364 = vadd.f32 0.0, %v1363
        %v1365 = vpop.f32.mrb[0].mxu0
        %1366 = vmatprep.mubr.f32.mxu0 0.0
        %1367 = vmatmul.mubr.f32.gmra.mrb[0].mxu0 %v1062
        %v1368 = vpop.f32.mrb[0].mxu0
        %v1369 = vadd.f32 0.0, %v1368
        %v1370 = vpop.f32.mrb[0].mxu0
        %1371 = vdwg.mxu0
        %v1372 = vadd.f32 %v919, %v1294
        %v1373 = vadd.f32 %v924, %v1299
        %v1374 = vadd.f32 %v929, %v1304
        %v1375 = vadd.f32 %v934, %v1309
        %v1376 = vadd.f32 %v939, %v1314
        %v1377 = vadd.f32 %v944, %v1319
        %v1378 = vadd.f32 %v949, %v1324
        %v1379 = vadd.f32 %v954, %v1329
        %v1380 = vadd.f32 %v959, %v1334
        %v1381 = vadd.f32 %v964, %v1339
        %v1382 = vadd.f32 %v969, %v1344
        %v1383 = vadd.f32 %v974, %v1349
        %v1384 = vadd.f32 %v979, %v1354
        %v1385 = vadd.f32 %v984, %v1359
        %v1386 = vadd.f32 %v989, %v1364
        %v1387 = vadd.f32 %v994, %v1369
        %1388 = vst [vmem:[#allocation2] sm:$0xff] %v1372
        %1389 = vst [vmem:[#allocation2 + $0x8] sm:$0xff] %v1373
        %1390 = vst [vmem:[#allocation2 + $0x10] sm:$0xff] %v1374
        %1391 = vst [vmem:[#allocation2 + $0x18] sm:$0xff] %v1375
        %1392 = vst [vmem:[#allocation2 + $0x20] sm:$0xff] %v1376
        %1393 = vst [vmem:[#allocation2 + $0x28] sm:$0xff] %v1377
        %1394 = vst [vmem:[#allocation2 + $0x30] sm:$0xff] %v1378
        %1395 = vst [vmem:[#allocation2 + $0x38] sm:$0xff] %v1379
        %1396 = vst [vmem:[#allocation2 + $0x40] sm:$0xff] %v1380
        %1397 = vst [vmem:[#allocation2 + $0x48] sm:$0xff] %v1381
        %1398 = vst [vmem:[#allocation2 + $0x50] sm:$0xff] %v1382
        %1399 = vst [vmem:[#allocation2 + $0x58] sm:$0xff] %v1383
        %1400 = vst [vmem:[#allocation2 + $0x60] sm:$0xff] %v1384
        %1401 = vst [vmem:[#allocation2 + $0x68] sm:$0xff] %v1385
        %1402 = vst [vmem:[#allocation2 + $0x70] sm:$0xff] %v1386
        %1403 = vst [vmem:[#allocation2 + $0x78] sm:$0xff] %v1387
        %1404 = vst [vmem:[#allocation2 + $0x80] sm:$0xff] 0.0
        %v1405 = vld [vmem:[#allocation2 + $0x1] sm:$0xff]
        %v1406 = vld [vmem:[#allocation2 + $0x9] sm:$0xff]
        %v1407 = vld [vmem:[#allocation2 + $0x11] sm:$0xff]
        %v1408 = vld [vmem:[#allocation2 + $0x19] sm:$0xff]
        %v1409 = vld [vmem:[#allocation2 + $0x21] sm:$0xff]
        %v1410 = vld [vmem:[#allocation2 + $0x29] sm:$0xff]
        %v1411 = vld [vmem:[#allocation2 + $0x31] sm:$0xff]
        %v1412 = vld [vmem:[#allocation2 + $0x39] sm:$0xff]
        %v1413 = vld [vmem:[#allocation2 + $0x41] sm:$0xff]
        %v1414 = vld [vmem:[#allocation2 + $0x49] sm:$0xff]
        %v1415 = vld [vmem:[#allocation2 + $0x51] sm:$0xff]
        %v1416 = vld [vmem:[#allocation2 + $0x59] sm:$0xff]
        %v1417 = vld [vmem:[#allocation2 + $0x61] sm:$0xff]
        %v1418 = vld [vmem:[#allocation2 + $0x69] sm:$0xff]
        %v1419 = vld [vmem:[#allocation2 + $0x71] sm:$0xff]
        %v1420 = vld [vmem:[#allocation2 + $0x79] sm:$0xff]
        %v1421 = vadd.f32 %v1209, %v1405
        %v1422 = vadd.f32 %v1210, %v1406
        %v1423 = vadd.f32 %v1211, %v1407
        %v1424 = vadd.f32 %v1212, %v1408
        %v1425 = vadd.f32 %v1213, %v1409
        %v1426 = vadd.f32 %v1214, %v1410
        %v1427 = vadd.f32 %v1215, %v1411
        %v1428 = vadd.f32 %v1216, %v1412
        %v1429 = vadd.f32 %v1217, %v1413
        %v1430 = vadd.f32 %v1218, %v1414
        %v1431 = vadd.f32 %v1219, %v1415
        %v1432 = vadd.f32 %v1220, %v1416
        %v1433 = vadd.f32 %v1221, %v1417
        %v1434 = vadd.f32 %v1222, %v1418
        %v1435 = vadd.f32 %v1223, %v1419
        %v1436 = vadd.f32 %v1224, %v1420
        %v1437 = vld [vmem:[%s278] sm:$0x1]
        %v1439 = vlaneseq
        %v1440 = vshrl.u32 %v1439, 7
        %v1441 = vsub.s32 0, %v1440
        %v1442 = vrot.slane %v1437, %v1441
        %v1444 = vadd.f32 %v1421, %v1442
        %v1445 = vadd.f32 %v1422, %v1442
        %v1446 = vadd.f32 %v1423, %v1442
        %v1447 = vadd.f32 %v1424, %v1442
        %v1448 = vadd.f32 %v1425, %v1442
        %v1449 = vadd.f32 %v1426, %v1442
        %v1450 = vadd.f32 %v1427, %v1442
        %v1451 = vadd.f32 %v1428, %v1442
        %v1452 = vadd.f32 %v1429, %v1442
        %v1453 = vadd.f32 %v1430, %v1442
        %v1454 = vadd.f32 %v1431, %v1442
        %v1455 = vadd.f32 %v1432, %v1442
        %v1456 = vadd.f32 %v1433, %v1442
        %v1457 = vadd.f32 %v1434, %v1442
        %v1458 = vadd.f32 %v1435, %v1442
        %v1459 = vadd.f32 %v1436, %v1442
        %1460 = vst [vmem:[%s258] sm:$0xff] %v1444
        %1461 = vst [vmem:[%s258 + $0x8] sm:$0xff] %v1445
        %1462 = vst [vmem:[%s258 + $0x10] sm:$0xff] %v1446
        %1463 = vst [vmem:[%s258 + $0x18] sm:$0xff] %v1447
        %1464 = vst [vmem:[%s258 + $0x20] sm:$0xff] %v1448
        %1465 = vst [vmem:[%s258 + $0x28] sm:$0xff] %v1449
        %1466 = vst [vmem:[%s258 + $0x30] sm:$0xff] %v1450
        %1467 = vst [vmem:[%s258 + $0x38] sm:$0xff] %v1451
        %1468 = vst [vmem:[%s258 + $0x40] sm:$0xff] %v1452
        %1469 = vst [vmem:[%s258 + $0x48] sm:$0xff] %v1453
        %1470 = vst [vmem:[%s258 + $0x50] sm:$0xff] %v1454
        %1471 = vst [vmem:[%s258 + $0x58] sm:$0xff] %v1455
        %1472 = vst [vmem:[%s258 + $0x60] sm:$0xff] %v1456
        %1473 = vst [vmem:[%s258 + $0x68] sm:$0xff] %v1457
        %1474 = vst [vmem:[%s258 + $0x70] sm:$0xff] %v1458
        %1475 = vst [vmem:[%s258 + $0x78] sm:$0xff] %v1459
        %s1476 = sand.u32 %s155, 1
        %s1477 = scalar_lea.sflag [#allocation4], %s1476
        %s1478 = sand.u32 %s155, 1
        %s1479 = smul.addr %s1478, 128
        %s1480 = scalar_lea.vmem [#allocation3], %s1479
        // Predicated region
        $region37: #{tpu_custom_call.1} parent=35 // pred_check
          %p1481 = pneg %p165
        $region38: #{tpu_custom_call.1} parent=35 // pred_check_branch
          %1483 = sbr.rel (%p1481) target = $region40
        $region39: #{tpu_custom_call.1} parent=35 // pred_region
          %s1484 = sadd.s32 %s23, %s24
          %s1485 = smul.u32 16, %s1484
          %s1487 = ssub.s32 2048, 2048
          %1488 = vsyncadd %s1477, %s1487
          %s1489 = sadd.s32 %s25, %s1485
          %s1490 = smul.addr %s1489, 128
          %s1491 = scalar_lea.hbm %s4, %s1490
          %s1492 = sshll.u32 %s1480, 4
          %s1493 = int_to_ptr.vmem [resolvable:$true] %s1492
          %1498 = dma.vmem_to_hbm [thread:$0]  %s1493, 2048, %s1491, %s1477, 128, 128, 8
        $region40: #{tpu_custom_call.1} parent=35 // pred_fallthru
          _
      $region36: #{tpu_custom_call.1} parent=5 // pred_fallthru
        _
      %p1499 = scmp.le.s32.totalorder 2, %s13
      // Predicated region
      $region41: #{tpu_custom_call.1} parent=5 // pred_check
        %p1500 = pneg %p1499
      $region42: #{tpu_custom_call.1} parent=5 // pred_check_branch
        %1502 = sbr.rel (%p1500) target = $region44
      $region43: #{tpu_custom_call.1} parent=5 // pred_region
        %s1503 = ssub.s32 %s13, 2
        // Predicated region
        $region45: #{tpu_custom_call.1} parent=43 // pred_check
          %p1504 = pneg %p171
        $region46: #{tpu_custom_call.1} parent=43 // pred_check_branch
          %1506 = sbr.rel (%p1504) target = $region48
        $region47: #{tpu_custom_call.1} parent=43 // pred_region
          %s1507 = sand.u32 %s156, 1
          %s1508 = scalar_lea.sflag [#allocation4], %s1507
          %s1509 = sand.u32 %s156, 1
          %s1510 = smul.addr %s1509, 128
          %s1511 = scalar_lea.vmem [#allocation3], %s1510
          %1512 = dma.done %s1508, 2048
        $region48: #{tpu_custom_call.1} parent=43 // pred_fallthru
          _
      $region44: #{tpu_custom_call.1} parent=5 // pred_fallthru
        _
    $region6: #{tpu_custom_call.1} parent=1 // loop_footer
      %s17 = sadd.s32 1, %s13
    $region7: #{tpu_custom_call.1} parent=1 // loop_footer_branch
      %12 = sbr.rel target = $region3
    $region8: #{tpu_custom_call.1} parent=1 // loop_exit
      _
    %1513 = vsyncpa [#allocation4], 1
    %s1514 = scalar_lea.sflag [#allocation4], 1
    %1515 = vsyncpa %s1514, 1

</llo_original>
